<compile_context>
chip_gen: v6e
topology: v6e:2x2x1
jax: 0.10.0
libtpu: 0.0.40
codegen_flags: <defaults>
</compile_context>

<pallas_src>
import jax
import jax.numpy as jnp
from jax import lax
from jax.experimental import pallas as pl
from jax.experimental.pallas import tpu as pltpu

# ----------------------------- problem sizes ---------------------------------
B = 2                  # batch
C = 32                 # n_channels
H = W = 8              # spatial
L = H * W              # tokens per sample = 64
BL = B * L             # batch-folded rows = 128
COND_C = 16            # cond_channels
LC = 8                 # cond sequence length
N_GROUPS = 8           # GroupNorm groups
CS = C // N_GROUPS     # channels per group = 4
N_HEADS = 1            # module default
HEAD = C // N_HEADS
SCALE = HEAD ** (-0.5)
EPS = 1e-5
KV_PAD = 128           # padded per-batch KV length (L + LC = 72 -> 128)
KV_ALL = B * KV_PAD    # 256: block-diagonal KV rows
PAD_ROWS = KV_PAD - (L + LC)   # 56 pad rows per batch block (sublane-aligned start)
NEG_INF = -1e30


# ------------------------------- kernel --------------------------------------
def attention_block_kernel(
    x_ref,        # (BL, C)            pre-norm tokens, batch folded into rows
    cond_ref,     # (B*LC, COND_C)
    prows_ref,    # (BL, BL)           row-pooling matrix (1/(L*CS) folded in)
    pcols_ref,    # (C, C)             channel-group pooling matrix
    gnw_ref,      # (1, C)             GroupNorm weight
    gnb_ref,      # (1, C)             GroupNorm bias
    qkvw_ref,     # (C, 3C)            fused qkv weight (SCALE folded into q third)
    qkvb_ref,     # (1, 3C)
    ckvw_ref,     # (COND_C, 2C)       fused cond kv weight
    ckvb_ref,     # (1, 2C)
    ow_ref,       # (C, C)             out_proj weight
    ob_ref,       # (1, C)
    mask_ref,     # (BL, KV_ALL)       additive block-diagonal + pad mask (0 / -1e30)
    o_ref,        # (BL, C)            output tokens (attn + residual)
    kbuf_ref,     # (KV_ALL, C)        VMEM scratch: block-diagonal padded K
    vbuf_ref,     # (KV_ALL, C)        VMEM scratch: block-diagonal padded V
):
    f32 = jnp.float32
    dot = lambda a, b: jnp.dot(a, b, preferred_element_type=f32)

    x = x_ref[...]                                                 # (BL, C)

    # ---- GroupNorm via precomputed pooling matrices (4 M=128 matmuls) ----
    pcols = pcols_ref[...]
    prows = prows_ref[...]
    mean_full = dot(prows, dot(x, pcols))                          # (BL, C) per-(batch,group) mean
    d = x - mean_full                                              # two-pass variance (stable)
    var_full = dot(prows, dot(d * d, pcols))                       # (BL, C)
    xn = d * (lax.rsqrt(var_full + EPS) * gnw_ref[...]) + gnb_ref[...]

    # ---- fused projections (q already carries the softmax scale) ----
    qkv = dot(xn, qkvw_ref[...]) + qkvb_ref[...]                   # (BL, 3C)
    q = qkv[:, 0 * C:1 * C]
    k = qkv[:, 1 * C:2 * C]
    v = qkv[:, 2 * C:3 * C]
    ckv = dot(cond_ref[...], ckvw_ref[...]) + ckvb_ref[...]        # (B*LC, 2C)
    ck = ckv[:, 0:C]
    cv = ckv[:, C:2 * C]

    # ---- block-diagonal padded KV scratch; zero only the pad rows ----
    zpad = jnp.zeros((PAD_ROWS, C), f32)
    for b in range(B):                                             # static 2-iter loop
        base = b * KV_PAD
        kbuf_ref[base:base + L, :] = k[b * L:(b + 1) * L, :]
        kbuf_ref[base + L:base + L + LC, :] = ck[b * LC:(b + 1) * LC, :]
        kbuf_ref[base + L + LC:base + KV_PAD, :] = zpad
        vbuf_ref[base:base + L, :] = v[b * L:(b + 1) * L, :]
        vbuf_ref[base + L:base + L + LC, :] = cv[b * LC:(b + 1) * LC, :]
        vbuf_ref[base + L + LC:base + KV_PAD, :] = zpad

    k_all = kbuf_ref[...]                                          # (KV_ALL, C)
    v_all = vbuf_ref[...]                                          # (KV_ALL, C)

    # ---- batched attention as one block-diagonal matmul pair ----
    scores = jnp.einsum('qc,kc->qk', q, k_all,
                        preferred_element_type=f32) + mask_ref[...]   # (BL, KV_ALL)
    smax = jnp.max(scores, axis=-1, keepdims=True)
    p = jnp.exp(scores - smax)                                     # masked/pad cols -> exactly 0
    attn = p * pl.reciprocal(jnp.sum(p, axis=-1, keepdims=True), approx=False)
    ctx = dot(attn, v_all)                                         # (BL, C)

    # ---- output projection + residual (dropout p=0.0 -> identity) ----
    # re-read x from VMEM to shorten its live range across the kernel
    o_ref[...] = dot(ctx, ow_ref[...]) + ob_ref[...] + x_ref[...]


# ------------------------------- wrapper --------------------------------------
def attention_block(x_0, cond, params):
    """x_0: (B, C, H, W) NCHW float32; cond: (B, LC, COND_C). Returns NCHW."""
    b, c, h, w = x_0.shape
    l = h * w
    x_tok = jnp.transpose(x_0, (0, 2, 3, 1)).reshape(b * l, c)     # (BL, C)
    cond2d = cond.reshape(b * LC, COND_C)                          # (B*LC, COND_C)

    gn_w, gn_b, qkv_w, qkv_b, ckv_w, ckv_b, o_w, o_b = params

    # fold the softmax scale into the q third of the fused qkv weights (trace-time)
    scale_vec = jnp.concatenate(
        [jnp.full((c,), SCALE, jnp.float32), jnp.ones((2 * c,), jnp.float32)])
    qkv_w_s = qkv_w * scale_vec[None, :]
    qkv_b_s = qkv_b * scale_vec[None, :]

    # GroupNorm pooling matrices (inv_n folded into the row-pooling matrix)
    row_b = jnp.arange(b * l) // l
    prows = (row_b[:, None] == row_b[None, :]).astype(jnp.float32) * (1.0 / (l * CS))
    col_g = jnp.arange(c) // CS
    pcols = (col_g[:, None] == col_g[None, :]).astype(jnp.float32)

    # additive attention mask: 0 where (same batch) & (col within L+LC), else -1e30
    kv_col = jnp.arange(b * KV_PAD)
    kv_col_b = kv_col // KV_PAD
    kv_col_ok = (kv_col % KV_PAD) < (L + LC)
    valid = (row_b[:, None] == kv_col_b[None, :]) & kv_col_ok[None, :]
    mask = jnp.where(valid, 0.0, NEG_INF).astype(jnp.float32)      # (BL, KV_ALL)

    full = lambda shape: pl.BlockSpec(shape, lambda i: (0,) * len(shape))

    out_tok = pl.pallas_call(
        attention_block_kernel,
        out_shape=jax.ShapeDtypeStruct((b * l, c), jnp.float32),
        grid=(1,),                                                 # single invocation: batch folded in
        in_specs=[
            full((b * l, c)),                                      # x tokens
            full((b * LC, COND_C)),                                # cond tokens
            full((b * l, b * l)),                                  # P_rows
            full((c, c)),                                          # P_cols
            full((1, c)), full((1, c)),                            # GroupNorm w, b
            full((c, 3 * c)), full((1, 3 * c)),                    # fused qkv W, b (q scaled)
            full((COND_C, 2 * c)), full((1, 2 * c)),               # fused cond kv W, b
            full((c, c)), full((1, c)),                            # out W, b
            full((b * l, b * KV_PAD)),                             # attention mask
        ],
        out_specs=full((b * l, c)),
        scratch_shapes=[
            pltpu.VMEM((b * KV_PAD, c), jnp.float32),              # block-diagonal padded K
            pltpu.VMEM((b * KV_PAD, c), jnp.float32),              # block-diagonal padded V
        ],
        compiler_params=pltpu.CompilerParams(
            dimension_semantics=("arbitrary",)),
    )(x_tok, cond2d, prows, pcols, gn_w, gn_b,
      qkv_w_s, qkv_b_s, ckv_w, ckv_b, o_w, o_b, mask)

    return jnp.transpose(out_tok.reshape(b, h, w, c), (0, 3, 1, 2))


# ------------------------ pure-JAX reference (for checking) -------------------
def reference(x_0, cond, params):
    gn_w, gn_b, qkv_w, qkv_b, ckv_w, ckv_b, o_w, o_b = params
    b, c, h, w = x_0.shape
    # GroupNorm (NCHW semantics, per sample per group over (C/G, H, W))
    xg = x_0.reshape(b, N_GROUPS, c // N_GROUPS, h, w)
    mean = jnp.mean(xg, axis=(2, 3, 4), keepdims=True)
    var = jnp.mean(jnp.square(xg - mean), axis=(2, 3, 4), keepdims=True)
    xn = ((xg - mean) / jnp.sqrt(var + EPS)).reshape(b, c, h, w)
    xn = xn * gn_w.reshape(1, c, 1, 1) + gn_b.reshape(1, c, 1, 1)
    x = jnp.transpose(xn, (0, 2, 3, 1)).reshape(b, h * w, c)
    qkv = x @ qkv_w + qkv_b
    q, k, v = qkv[..., :c], qkv[..., c:2 * c], qkv[..., 2 * c:]
    ckv = cond @ ckv_w + ckv_b
    k = jnp.concatenate([k, ckv[..., :c]], axis=1)
    v = jnp.concatenate([v, ckv[..., c:]], axis=1)
    a = jax.nn.softmax(jnp.einsum('blc,bmc->blm', q, k) * SCALE, axis=-1)
    ctx = jnp.einsum('blm,bmc->blc', a, v)
    out = ctx @ o_w + o_b
    out = jnp.transpose(out.reshape(b, h, w, c), (0, 3, 1, 2))
    return out + x_0


# --------------------------------- main ----------------------------------------
if __name__ == "__main__":
    key = jax.random.PRNGKey(0)
    ks = jax.random.split(key, 10)

    x_0 = jax.random.normal(ks[0], (B, C, H, W), jnp.float32)
    cond = jax.random.normal(ks[1], (B, LC, COND_C), jnp.float32)

    # Deterministic parameter init (synthetic; not loaded from a checkpoint).
    gn_w = (1.0 + 0.02 * jax.random.normal(ks[2], (C,), jnp.float32)).reshape(1, C)
    gn_b = (0.02 * jax.random.normal(ks[3], (C,), jnp.float32)).reshape(1, C)
    qkv_w = 0.1 * jax.random.normal(ks[4], (C, 3 * C), jnp.float32)       # x @ W form
    qkv_b = 0.02 * jax.random.normal(ks[5], (1, 3 * C), jnp.float32)
    ckv_w = 0.1 * jax.random.normal(ks[6], (COND_C, 2 * C), jnp.float32)
    ckv_b = 0.02 * jax.random.normal(ks[7], (1, 2 * C), jnp.float32)
    o_w = 0.1 * jax.random.normal(ks[8], (C, C), jnp.float32)
    o_b = 0.02 * jax.random.normal(ks[9], (1, C), jnp.float32)

    params = (gn_w, gn_b, qkv_w, qkv_b, ckv_w, ckv_b, o_w, o_b)

    out = attention_block(x_0, cond, params)
    out = jax.block_until_ready(out)

    ref = jax.block_until_ready(reference(x_0, cond, params))
    assert out.shape == x_0.shape and out.dtype == jnp.float32
    assert jnp.allclose(out, ref, rtol=1e-4, atol=1e-4), (
        float(jnp.max(jnp.abs(out - ref))))

    print("KERNEL_OK")
</pallas_src>

<mosaic_0001>
module attributes {stable_mosaic.version = 11 : i64} {
  func.func @attention_block_kernel(%arg0: i32, %arg1: memref<128x32xf32, #tpu.memory_space<vmem>>, %arg2: memref<16x16xf32, #tpu.memory_space<vmem>>, %arg3: memref<128x128xf32, #tpu.memory_space<vmem>>, %arg4: memref<32x32xf32, #tpu.memory_space<vmem>>, %arg5: memref<1x32xf32, #tpu.memory_space<vmem>>, %arg6: memref<1x32xf32, #tpu.memory_space<vmem>>, %arg7: memref<32x96xf32, #tpu.memory_space<vmem>>, %arg8: memref<1x96xf32, #tpu.memory_space<vmem>>, %arg9: memref<16x64xf32, #tpu.memory_space<vmem>>, %arg10: memref<1x64xf32, #tpu.memory_space<vmem>>, %arg11: memref<32x32xf32, #tpu.memory_space<vmem>>, %arg12: memref<1x32xf32, #tpu.memory_space<vmem>>, %arg13: memref<128x256xf32, #tpu.memory_space<vmem>>, %arg14: memref<128x32xf32, #tpu.memory_space<vmem>>, %arg15: memref<256x32xf32, #tpu.memory_space<vmem>>, %arg16: memref<256x32xf32, #tpu.memory_space<vmem>>) attributes {dimension_semantics = [#tpu.dimension_semantics<arbitrary>], iteration_bounds = array<i64: 1>, scalar_prefetch = 0 : i64, scratch_operands = 2 : i64, tpu.core_type = #tpu.core_type<tc>, window_params = [{pipeline_mode = #tpu.pipeline_mode<synchronous>, transform_indices = @transform_0, window_bounds = array<i64: 128, 32>}, {pipeline_mode = #tpu.pipeline_mode<synchronous>, transform_indices = @transform_1, window_bounds = array<i64: 16, 16>}, {pipeline_mode = #tpu.pipeline_mode<synchronous>, transform_indices = @transform_2, window_bounds = array<i64: 128, 128>}, {pipeline_mode = #tpu.pipeline_mode<synchronous>, transform_indices = @transform_3, window_bounds = array<i64: 32, 32>}, {pipeline_mode = #tpu.pipeline_mode<synchronous>, transform_indices = @transform_4, window_bounds = array<i64: 1, 32>}, {pipeline_mode = #tpu.pipeline_mode<synchronous>, transform_indices = @transform_5, window_bounds = array<i64: 1, 32>}, {pipeline_mode = #tpu.pipeline_mode<synchronous>, transform_indices = @transform_6, window_bounds = array<i64: 32, 96>}, {pipeline_mode = #tpu.pipeline_mode<synchronous>, transform_indices = @transform_7, window_bounds = array<i64: 1, 96>}, {pipeline_mode = #tpu.pipeline_mode<synchronous>, transform_indices = @transform_8, window_bounds = array<i64: 16, 64>}, {pipeline_mode = #tpu.pipeline_mode<synchronous>, transform_indices = @transform_9, window_bounds = array<i64: 1, 64>}, {pipeline_mode = #tpu.pipeline_mode<synchronous>, transform_indices = @transform_10, window_bounds = array<i64: 32, 32>}, {pipeline_mode = #tpu.pipeline_mode<synchronous>, transform_indices = @transform_11, window_bounds = array<i64: 1, 32>}, {pipeline_mode = #tpu.pipeline_mode<synchronous>, transform_indices = @transform_12, window_bounds = array<i64: 128, 256>}, {pipeline_mode = #tpu.pipeline_mode<synchronous>, transform_indices = @transform_13, window_bounds = array<i64: 128, 32>}]} {
    %c0 = arith.constant 0 : index
    %c0_0 = arith.constant 0 : index
    %0 = vector.load %arg1[%c0, %c0_0] : memref<128x32xf32, #tpu.memory_space<vmem>>, vector<128x32xf32>
    %c0_1 = arith.constant 0 : index
    %c0_2 = arith.constant 0 : index
    %1 = vector.load %arg4[%c0_1, %c0_2] : memref<32x32xf32, #tpu.memory_space<vmem>>, vector<32x32xf32>
    %c0_3 = arith.constant 0 : index
    %c0_4 = arith.constant 0 : index
    %2 = vector.load %arg3[%c0_3, %c0_4] : memref<128x128xf32, #tpu.memory_space<vmem>>, vector<128x128xf32>
    %cst = arith.constant dense<0.000000e+00> : vector<128x32xf32>
    %3 = tpu.matmul %0, %1, %cst {dimension_numbers = #tpu.dot_dimension_numbers<[1], [0], [0], [1], [0, 0, 1, 1], [], []>} : vector<128x32xf32>, vector<32x32xf32>, vector<128x32xf32> -> vector<128x32xf32>
    %cst_5 = arith.constant dense<0.000000e+00> : vector<128x32xf32>
    %4 = tpu.matmul %2, %3, %cst_5 {dimension_numbers = #tpu.dot_dimension_numbers<[1], [0], [0], [1], [0, 0, 1, 1], [], []>} : vector<128x128xf32>, vector<128x32xf32>, vector<128x32xf32> -> vector<128x32xf32>
    %5 = arith.subf %0, %4 : vector<128x32xf32>
    %6 = arith.mulf %5, %5 : vector<128x32xf32>
    %cst_6 = arith.constant dense<0.000000e+00> : vector<128x32xf32>
    %7 = tpu.matmul %6, %1, %cst_6 {dimension_numbers = #tpu.dot_dimension_numbers<[1], [0], [0], [1], [0, 0, 1, 1], [], []>} : vector<128x32xf32>, vector<32x32xf32>, vector<128x32xf32> -> vector<128x32xf32>
    %cst_7 = arith.constant dense<0.000000e+00> : vector<128x32xf32>
    %8 = tpu.matmul %2, %7, %cst_7 {dimension_numbers = #tpu.dot_dimension_numbers<[1], [0], [0], [1], [0, 0, 1, 1], [], []>} : vector<128x128xf32>, vector<128x32xf32>, vector<128x32xf32> -> vector<128x32xf32>
    %cst_8 = arith.constant 9.99999974E-6 : f32
    %9 = vector.broadcast %cst_8 : f32 to vector<128x32xf32>
    %10 = arith.addf %8, %9 : vector<128x32xf32>
    %11 = math.rsqrt %10 : vector<128x32xf32>
    %c0_9 = arith.constant 0 : index
    %c0_10 = arith.constant 0 : index
    %12 = vector.load %arg5[%c0_9, %c0_10] : memref<1x32xf32, #tpu.memory_space<vmem>>, vector<1x32xf32>
    %13 = vector.broadcast %12 : vector<1x32xf32> to vector<128x32xf32>
    %14 = arith.mulf %11, %13 : vector<128x32xf32>
    %15 = arith.mulf %5, %14 : vector<128x32xf32>
    %c0_11 = arith.constant 0 : index
    %c0_12 = arith.constant 0 : index
    %16 = vector.load %arg6[%c0_11, %c0_12] : memref<1x32xf32, #tpu.memory_space<vmem>>, vector<1x32xf32>
    %17 = vector.broadcast %16 : vector<1x32xf32> to vector<128x32xf32>
    %18 = arith.addf %15, %17 : vector<128x32xf32>
    %c0_13 = arith.constant 0 : index
    %c0_14 = arith.constant 0 : index
    %19 = vector.load %arg7[%c0_13, %c0_14] : memref<32x96xf32, #tpu.memory_space<vmem>>, vector<32x96xf32>
    %cst_15 = arith.constant dense<0.000000e+00> : vector<128x96xf32>
    %20 = tpu.matmul %18, %19, %cst_15 {dimension_numbers = #tpu.dot_dimension_numbers<[1], [0], [0], [1], [0, 0, 1, 1], [], []>} : vector<128x32xf32>, vector<32x96xf32>, vector<128x96xf32> -> vector<128x96xf32>
    %c0_16 = arith.constant 0 : index
    %c0_17 = arith.constant 0 : index
    %21 = vector.load %arg8[%c0_16, %c0_17] : memref<1x96xf32, #tpu.memory_space<vmem>>, vector<1x96xf32>
    %22 = vector.broadcast %21 : vector<1x96xf32> to vector<128x96xf32>
    %23 = arith.addf %20, %22 : vector<128x96xf32>
    %24 = vector.extract_strided_slice %23 {offsets = [0, 0], sizes = [128, 32], strides = [1, 1]} : vector<128x96xf32> to vector<128x32xf32>
    %25 = vector.extract_strided_slice %23 {offsets = [0, 32], sizes = [128, 32], strides = [1, 1]} : vector<128x96xf32> to vector<128x32xf32>
    %26 = vector.extract_strided_slice %23 {offsets = [0, 64], sizes = [128, 32], strides = [1, 1]} : vector<128x96xf32> to vector<128x32xf32>
    %c0_18 = arith.constant 0 : index
    %c0_19 = arith.constant 0 : index
    %27 = vector.load %arg2[%c0_18, %c0_19] : memref<16x16xf32, #tpu.memory_space<vmem>>, vector<16x16xf32>
    %c0_20 = arith.constant 0 : index
    %c0_21 = arith.constant 0 : index
    %28 = vector.load %arg9[%c0_20, %c0_21] : memref<16x64xf32, #tpu.memory_space<vmem>>, vector<16x64xf32>
    %cst_22 = arith.constant dense<0.000000e+00> : vector<16x64xf32>
    %29 = tpu.matmul %27, %28, %cst_22 {dimension_numbers = #tpu.dot_dimension_numbers<[1], [0], [0], [1], [0, 0, 1, 1], [], []>} : vector<16x16xf32>, vector<16x64xf32>, vector<16x64xf32> -> vector<16x64xf32>
    %c0_23 = arith.constant 0 : index
    %c0_24 = arith.constant 0 : index
    %30 = vector.load %arg10[%c0_23, %c0_24] : memref<1x64xf32, #tpu.memory_space<vmem>>, vector<1x64xf32>
    %31 = vector.broadcast %30 : vector<1x64xf32> to vector<16x64xf32>
    %32 = arith.addf %29, %31 : vector<16x64xf32>
    %33 = vector.extract_strided_slice %32 {offsets = [0, 0], sizes = [16, 32], strides = [1, 1]} : vector<16x64xf32> to vector<16x32xf32>
    %34 = vector.extract_strided_slice %32 {offsets = [0, 32], sizes = [16, 32], strides = [1, 1]} : vector<16x64xf32> to vector<16x32xf32>
    %cst_25 = arith.constant 0.000000e+00 : f32
    %35 = vector.broadcast %cst_25 : f32 to vector<56x32xf32>
    %36 = vector.extract_strided_slice %25 {offsets = [0, 0], sizes = [64, 32], strides = [1, 1]} : vector<128x32xf32> to vector<64x32xf32>
    %c0_26 = arith.constant 0 : index
    %c0_27 = arith.constant 0 : index
    %37 = vector.load %arg15[%c0_26, %c0_27] : memref<256x32xf32, #tpu.memory_space<vmem>>, vector<64x32xf32>
    tpu.vector_store %arg15[%c0_26, %c0_27], %36 {strides = array<i32>} : memref<256x32xf32, #tpu.memory_space<vmem>>, vector<64x32xf32>,
    %38 = vector.extract_strided_slice %33 {offsets = [0, 0], sizes = [8, 32], strides = [1, 1]} : vector<16x32xf32> to vector<8x32xf32>
    %c64 = arith.constant 64 : index
    %c0_28 = arith.constant 0 : index
    %39 = vector.load %arg15[%c64, %c0_28] : memref<256x32xf32, #tpu.memory_space<vmem>>, vector<8x32xf32>
    tpu.vector_store %arg15[%c64, %c0_28], %38 {strides = array<i32>} : memref<256x32xf32, #tpu.memory_space<vmem>>, vector<8x32xf32>,
    %c72 = arith.constant 72 : index
    %c0_29 = arith.constant 0 : index
    %40 = vector.load %arg15[%c72, %c0_29] : memref<256x32xf32, #tpu.memory_space<vmem>>, vector<56x32xf32>
    tpu.vector_store %arg15[%c72, %c0_29], %35 {strides = array<i32>} : memref<256x32xf32, #tpu.memory_space<vmem>>, vector<56x32xf32>,
    %41 = vector.extract_strided_slice %26 {offsets = [0, 0], sizes = [64, 32], strides = [1, 1]} : vector<128x32xf32> to vector<64x32xf32>
    %c0_30 = arith.constant 0 : index
    %c0_31 = arith.constant 0 : index
    %42 = vector.load %arg16[%c0_30, %c0_31] : memref<256x32xf32, #tpu.memory_space<vmem>>, vector<64x32xf32>
    tpu.vector_store %arg16[%c0_30, %c0_31], %41 {strides = array<i32>} : memref<256x32xf32, #tpu.memory_space<vmem>>, vector<64x32xf32>,
    %43 = vector.extract_strided_slice %34 {offsets = [0, 0], sizes = [8, 32], strides = [1, 1]} : vector<16x32xf32> to vector<8x32xf32>
    %c64_32 = arith.constant 64 : index
    %c0_33 = arith.constant 0 : index
    %44 = vector.load %arg16[%c64_32, %c0_33] : memref<256x32xf32, #tpu.memory_space<vmem>>, vector<8x32xf32>
    tpu.vector_store %arg16[%c64_32, %c0_33], %43 {strides = array<i32>} : memref<256x32xf32, #tpu.memory_space<vmem>>, vector<8x32xf32>,
    %c72_34 = arith.constant 72 : index
    %c0_35 = arith.constant 0 : index
    %45 = vector.load %arg16[%c72_34, %c0_35] : memref<256x32xf32, #tpu.memory_space<vmem>>, vector<56x32xf32>
    tpu.vector_store %arg16[%c72_34, %c0_35], %35 {strides = array<i32>} : memref<256x32xf32, #tpu.memory_space<vmem>>, vector<56x32xf32>,
    %46 = vector.extract_strided_slice %25 {offsets = [64, 0], sizes = [64, 32], strides = [1, 1]} : vector<128x32xf32> to vector<64x32xf32>
    %c128 = arith.constant 128 : index
    %c0_36 = arith.constant 0 : index
    %47 = vector.load %arg15[%c128, %c0_36] : memref<256x32xf32, #tpu.memory_space<vmem>>, vector<64x32xf32>
    tpu.vector_store %arg15[%c128, %c0_36], %46 {strides = array<i32>} : memref<256x32xf32, #tpu.memory_space<vmem>>, vector<64x32xf32>,
    %48 = vector.extract_strided_slice %33 {offsets = [8, 0], sizes = [8, 32], strides = [1, 1]} : vector<16x32xf32> to vector<8x32xf32>
    %c192 = arith.constant 192 : index
    %c0_37 = arith.constant 0 : index
    %49 = vector.load %arg15[%c192, %c0_37] : memref<256x32xf32, #tpu.memory_space<vmem>>, vector<8x32xf32>
    tpu.vector_store %arg15[%c192, %c0_37], %48 {strides = array<i32>} : memref<256x32xf32, #tpu.memory_space<vmem>>, vector<8x32xf32>,
    %c200 = arith.constant 200 : index
    %c0_38 = arith.constant 0 : index
    %50 = vector.load %arg15[%c200, %c0_38] : memref<256x32xf32, #tpu.memory_space<vmem>>, vector<56x32xf32>
    tpu.vector_store %arg15[%c200, %c0_38], %35 {strides = array<i32>} : memref<256x32xf32, #tpu.memory_space<vmem>>, vector<56x32xf32>,
    %51 = vector.extract_strided_slice %26 {offsets = [64, 0], sizes = [64, 32], strides = [1, 1]} : vector<128x32xf32> to vector<64x32xf32>
    %c128_39 = arith.constant 128 : index
    %c0_40 = arith.constant 0 : index
    %52 = vector.load %arg16[%c128_39, %c0_40] : memref<256x32xf32, #tpu.memory_space<vmem>>, vector<64x32xf32>
    tpu.vector_store %arg16[%c128_39, %c0_40], %51 {strides = array<i32>} : memref<256x32xf32, #tpu.memory_space<vmem>>, vector<64x32xf32>,
    %53 = vector.extract_strided_slice %34 {offsets = [8, 0], sizes = [8, 32], strides = [1, 1]} : vector<16x32xf32> to vector<8x32xf32>
    %c192_41 = arith.constant 192 : index
    %c0_42 = arith.constant 0 : index
    %54 = vector.load %arg16[%c192_41, %c0_42] : memref<256x32xf32, #tpu.memory_space<vmem>>, vector<8x32xf32>
    tpu.vector_store %arg16[%c192_41, %c0_42], %53 {strides = array<i32>} : memref<256x32xf32, #tpu.memory_space<vmem>>, vector<8x32xf32>,
    %c200_43 = arith.constant 200 : index
    %c0_44 = arith.constant 0 : index
    %55 = vector.load %arg16[%c200_43, %c0_44] : memref<256x32xf32, #tpu.memory_space<vmem>>, vector<56x32xf32>
    tpu.vector_store %arg16[%c200_43, %c0_44], %35 {strides = array<i32>} : memref<256x32xf32, #tpu.memory_space<vmem>>, vector<56x32xf32>,
    %c0_45 = arith.constant 0 : index
    %c0_46 = arith.constant 0 : index
    %56 = vector.load %arg15[%c0_45, %c0_46] : memref<256x32xf32, #tpu.memory_space<vmem>>, vector<256x32xf32>
    %c0_47 = arith.constant 0 : index
    %c0_48 = arith.constant 0 : index
    %57 = vector.load %arg16[%c0_47, %c0_48] : memref<256x32xf32, #tpu.memory_space<vmem>>, vector<256x32xf32>
    "tpu.trace_start"() <{level = 10 : i32, message = "qc,kc->qk"}> : () -> ()
    %cst_49 = arith.constant dense<0.000000e+00> : vector<128x256xf32>
    %58 = tpu.matmul %24, %56, %cst_49 {dimension_numbers = #tpu.dot_dimension_numbers<[1], [1], [0], [0], [0, 0, 1, 0], [], []>} : vector<128x32xf32>, vector<256x32xf32>, vector<128x256xf32> -> vector<128x256xf32>
    "tpu.trace_stop"() : () -> ()
    %c0_50 = arith.constant 0 : index
    %c0_51 = arith.constant 0 : index
    %59 = vector.load %arg13[%c0_50, %c0_51] : memref<128x256xf32, #tpu.memory_space<vmem>>, vector<128x256xf32>
    %60 = arith.addf %58, %59 : vector<128x256xf32>
    %cst_52 = arith.constant dense<0xFF800000> : vector<128xf32>
    %61 = vector.multi_reduction <maximumf>, %60, %cst_52 [1] : vector<128x256xf32> to vector<128xf32>
    %62 = vector.shape_cast %61 : vector<128xf32> to vector<128x1xf32>
    %63 = vector.broadcast %62 : vector<128x1xf32> to vector<128x256xf32>
    %64 = arith.subf %60, %63 : vector<128x256xf32>
    %65 = math.exp %64 : vector<128x256xf32>
    %cst_53 = arith.constant dense<0.000000e+00> : vector<128xf32>
    %66 = vector.multi_reduction <add>, %65, %cst_53 [1] : vector<128x256xf32> to vector<128xf32>
    %67 = vector.shape_cast %66 : vector<128xf32> to vector<128x1xf32>
    %68 = tpu.reciprocal %67 : vector<128x1xf32> -> vector<128x1xf32>
    %69 = vector.broadcast %68 : vector<128x1xf32> to vector<128x256xf32>
    %70 = arith.mulf %65, %69 : vector<128x256xf32>
    %cst_54 = arith.constant dense<0.000000e+00> : vector<128x32xf32>
    %71 = tpu.matmul %70, %57, %cst_54 {dimension_numbers = #tpu.dot_dimension_numbers<[1], [0], [0], [1], [0, 0, 1, 1], [], []>} : vector<128x256xf32>, vector<256x32xf32>, vector<128x32xf32> -> vector<128x32xf32>
    %c0_55 = arith.constant 0 : index
    %c0_56 = arith.constant 0 : index
    %72 = vector.load %arg11[%c0_55, %c0_56] : memref<32x32xf32, #tpu.memory_space<vmem>>, vector<32x32xf32>
    %cst_57 = arith.constant dense<0.000000e+00> : vector<128x32xf32>
    %73 = tpu.matmul %71, %72, %cst_57 {dimension_numbers = #tpu.dot_dimension_numbers<[1], [0], [0], [1], [0, 0, 1, 1], [], []>} : vector<128x32xf32>, vector<32x32xf32>, vector<128x32xf32> -> vector<128x32xf32>
    %c0_58 = arith.constant 0 : index
    %c0_59 = arith.constant 0 : index
    %74 = vector.load %arg12[%c0_58, %c0_59] : memref<1x32xf32, #tpu.memory_space<vmem>>, vector<1x32xf32>
    %75 = vector.broadcast %74 : vector<1x32xf32> to vector<128x32xf32>
    %76 = arith.addf %73, %75 : vector<128x32xf32>
    %c0_60 = arith.constant 0 : index
    %c0_61 = arith.constant 0 : index
    %77 = vector.load %arg1[%c0_60, %c0_61] : memref<128x32xf32, #tpu.memory_space<vmem>>, vector<128x32xf32>
    %78 = arith.addf %76, %77 : vector<128x32xf32>
    %c0_62 = arith.constant 0 : index
    %c0_63 = arith.constant 0 : index
    %79 = vector.load %arg14[%c0_62, %c0_63] : memref<128x32xf32, #tpu.memory_space<vmem>>, vector<128x32xf32>
    tpu.vector_store %arg14[%c0_62, %c0_63], %78 {strides = array<i32>} : memref<128x32xf32, #tpu.memory_space<vmem>>, vector<128x32xf32>,
    return
  }
  func.func @transform_0(%arg0: i32) -> (i32, i32) {
    %c0_i32 = arith.constant 0 : i32
    %c0_i32_0 = arith.constant 0 : i32
    %c0_i32_1 = arith.constant 0 : i32
    return %c0_i32, %c0_i32_0 : i32, i32
  }
  func.func @transform_1(%arg0: i32) -> (i32, i32) {
    %c0_i32 = arith.constant 0 : i32
    %c0_i32_0 = arith.constant 0 : i32
    %c0_i32_1 = arith.constant 0 : i32
    return %c0_i32, %c0_i32_0 : i32, i32
  }
  func.func @transform_2(%arg0: i32) -> (i32, i32) {
    %c0_i32 = arith.constant 0 : i32
    %c0_i32_0 = arith.constant 0 : i32
    %c0_i32_1 = arith.constant 0 : i32
    return %c0_i32, %c0_i32_0 : i32, i32
  }
  func.func @transform_3(%arg0: i32) -> (i32, i32) {
    %c0_i32 = arith.constant 0 : i32
    %c0_i32_0 = arith.constant 0 : i32
    %c0_i32_1 = arith.constant 0 : i32
    return %c0_i32, %c0_i32_0 : i32, i32
  }
  func.func @transform_4(%arg0: i32) -> (i32, i32) {
    %c0_i32 = arith.constant 0 : i32
    %c0_i32_0 = arith.constant 0 : i32
    %c0_i32_1 = arith.constant 0 : i32
    return %c0_i32, %c0_i32_0 : i32, i32
  }
  func.func @transform_5(%arg0: i32) -> (i32, i32) {
    %c0_i32 = arith.constant 0 : i32
    %c0_i32_0 = arith.constant 0 : i32
    %c0_i32_1 = arith.constant 0 : i32
    return %c0_i32, %c0_i32_0 : i32, i32
  }
  func.func @transform_6(%arg0: i32) -> (i32, i32) {
    %c0_i32 = arith.constant 0 : i32
    %c0_i32_0 = arith.constant 0 : i32
    %c0_i32_1 = arith.constant 0 : i32
    return %c0_i32, %c0_i32_0 : i32, i32
  }
  func.func @transform_7(%arg0: i32) -> (i32, i32) {
    %c0_i32 = arith.constant 0 : i32
    %c0_i32_0 = arith.constant 0 : i32
    %c0_i32_1 = arith.constant 0 : i32
    return %c0_i32, %c0_i32_0 : i32, i32
  }
  func.func @transform_8(%arg0: i32) -> (i32, i32) {
    %c0_i32 = arith.constant 0 : i32
    %c0_i32_0 = arith.constant 0 : i32
    %c0_i32_1 = arith.constant 0 : i32
    return %c0_i32, %c0_i32_0 : i32, i32
  }
  func.func @transform_9(%arg0: i32) -> (i32, i32) {
    %c0_i32 = arith.constant 0 : i32
    %c0_i32_0 = arith.constant 0 : i32
    %c0_i32_1 = arith.constant 0 : i32
    return %c0_i32, %c0_i32_0 : i32, i32
  }
  func.func @transform_10(%arg0: i32) -> (i32, i32) {
    %c0_i32 = arith.constant 0 : i32
    %c0_i32_0 = arith.constant 0 : i32
    %c0_i32_1 = arith.constant 0 : i32
    return %c0_i32, %c0_i32_0 : i32, i32
  }
  func.func @transform_11(%arg0: i32) -> (i32, i32) {
    %c0_i32 = arith.constant 0 : i32
    %c0_i32_0 = arith.constant 0 : i32
    %c0_i32_1 = arith.constant 0 : i32
    return %c0_i32, %c0_i32_0 : i32, i32
  }
  func.func @transform_12(%arg0: i32) -> (i32, i32) {
    %c0_i32 = arith.constant 0 : i32
    %c0_i32_0 = arith.constant 0 : i32
    %c0_i32_1 = arith.constant 0 : i32
    return %c0_i32, %c0_i32_0 : i32, i32
  }
  func.func @transform_13(%arg0: i32) -> (i32, i32) {
    %c0_i32 = arith.constant 0 : i32
    %c0_i32_0 = arith.constant 0 : i32
    %c0_i32_1 = arith.constant 0 : i32
    return %c0_i32, %c0_i32_0 : i32, i32
  }
}

</mosaic_0001>

<llo_original>
// kernel: tpu_custom_call.1
$region0: #{tpu_custom_call.1}
  #allocation0 [shape = 'u32[]', space=smem, size = 0x4, offset = 0x4, fixed_abs, tag = 'smem constant byte address 0x4 - core index']
  #allocation1 [shape = 'u32[144,128]{1,0:T(1,128)}', space=vmem, size = 0x12000, scoped, tag = 'internal scratch']
  #allocation2 [shape = 'f32[256,32]{1,0:T(8,128)}', space=vmem, size = 0x20000, scoped, tag = 'scratch operand']
  #allocation3 [shape = 'f32[256,32]{1,0:T(8,128)}', space=vmem, size = 0x20000, scoped, tag = 'scratch operand']
  %s0 = inlined_call_operand.vmem [shape: f32[128,32], index: 0, kind: input, shape index: {}]
  %s1 = inlined_call_operand.hbm [shape: f32[16,16], index: 1, kind: input, shape index: {}]
  %s2 = inlined_call_operand.vmem [shape: f32[128,128], index: 2, kind: input, shape index: {}]
  %s3 = inlined_call_operand.vmem [shape: f32[32,32], index: 3, kind: input, shape index: {}]
  %s4 = inlined_call_operand.vmem [shape: f32[1,32], index: 4, kind: input, shape index: {}]
  %s5 = inlined_call_operand.vmem [shape: f32[1,32], index: 5, kind: input, shape index: {}]
  %s6 = inlined_call_operand.hbm [shape: f32[32,96], index: 6, kind: input, shape index: {}]
  %s7 = inlined_call_operand.vmem [shape: f32[1,96], index: 7, kind: input, shape index: {}]
  %s8 = inlined_call_operand.hbm [shape: f32[16,64], index: 8, kind: input, shape index: {}]
  %s9 = inlined_call_operand.vmem [shape: f32[1,64], index: 9, kind: input, shape index: {}]
  %s10 = inlined_call_operand.hbm [shape: f32[32,32], index: 10, kind: input, shape index: {}]
  %s11 = inlined_call_operand.vmem [shape: f32[1,32], index: 11, kind: input, shape index: {}]
  %s12 = inlined_call_operand.hbm [shape: f32[128,256], index: 12, kind: input, shape index: {}]
  %s13 = inlined_call_operand.vmem [shape: f32[128,32], index: 13, kind: output, shape index: {}]
  %s14 = sld [smem:[#allocation0]]
  $region82: #{tpu_custom_call.1} parent=0
    _
  %s16 = ssub.s32 1, %s14
  %s17 = scalar_select 0, %s16, %s14
  $region1: #{tpu_custom_call.1} parent=0
    #allocation4 [shape = 'u8[8192]{0}', space=vmem, size = 0x2000, scoped, tag = 'input window, operand 1, single buffered']
    #allocation5 [shape = 's32[1]{0}', space=sflag, size = 0x4, scoped, tag = 'scoped memory for tpu_custom_call.1']
    #allocation6 [shape = 'u8[16384]{0}', space=vmem, size = 0x4000, scoped, tag = 'input window, operand 6, single buffered']
    #allocation7 [shape = 's32[1]{0}', space=sflag, size = 0x4, scoped, tag = 'scoped memory for tpu_custom_call.1']
    #allocation8 [shape = 'u8[8192]{0}', space=vmem, size = 0x2000, scoped, tag = 'input window, operand 8, single buffered']
    #allocation9 [shape = 'u8[16384]{0}', space=vmem, size = 0x4000, scoped, tag = 'input window, operand 10, single buffered']
    #allocation10 [shape = 's32[1]{0}', space=sflag, size = 0x4, scoped, tag = 'scoped memory for tpu_custom_call.1']
    #allocation11 [shape = 'u8[131072]{0}', space=vmem, size = 0x20000, scoped, tag = 'input window, operand 12, single buffered']
    %18 = vsyncpa [#allocation5], 0
    %19 = vsyncpa [#allocation7], 0
    %20 = vsyncpa [#allocation10], 0
    // Predicated region
    $region2: #{tpu_custom_call.1} parent=1 // pred_check
      _
    $region3: #{tpu_custom_call.1} parent=1 // pred_check_branch
      %22 = sbr.rel (0) target = $region5
    $region4: #{tpu_custom_call.1} parent=1 // pred_region
      _
    $region5: #{tpu_custom_call.1} parent=1 // pred_fallthru
      _
    // Predicated region
    $region6: #{tpu_custom_call.1} parent=1 // pred_check
      _
    $region7: #{tpu_custom_call.1} parent=1 // pred_check_branch
      %24 = sbr.rel (0) target = $region9
    $region8: #{tpu_custom_call.1} parent=1 // pred_region
      %s26 = ssub.s32 256, 256
      %27 = vsyncadd [#allocation5], %s26
      %s28 = sshll.u32 [#allocation4], 4
      %s29 = int_to_ptr.vmem [resolvable:$true] %s28
      %34 = dma.hbm_to_vmem [thread:$0]  %s1, 256, %s29, [#allocation5], 128, 128, 8
    $region9: #{tpu_custom_call.1} parent=1 // pred_fallthru
      _
    // Predicated region
    $region10: #{tpu_custom_call.1} parent=1 // pred_check
      _
    $region11: #{tpu_custom_call.1} parent=1 // pred_check_branch
      %36 = sbr.rel (0) target = $region13
    $region12: #{tpu_custom_call.1} parent=1 // pred_region
      _
    $region13: #{tpu_custom_call.1} parent=1 // pred_fallthru
      _
    // Predicated region
    $region14: #{tpu_custom_call.1} parent=1 // pred_check
      _
    $region15: #{tpu_custom_call.1} parent=1 // pred_check_branch
      %38 = sbr.rel (0) target = $region17
    $region16: #{tpu_custom_call.1} parent=1 // pred_region
      _
    $region17: #{tpu_custom_call.1} parent=1 // pred_fallthru
      _
    // Predicated region
    $region18: #{tpu_custom_call.1} parent=1 // pred_check
      _
    $region19: #{tpu_custom_call.1} parent=1 // pred_check_branch
      %40 = sbr.rel (0) target = $region21
    $region20: #{tpu_custom_call.1} parent=1 // pred_region
      _
    $region21: #{tpu_custom_call.1} parent=1 // pred_fallthru
      _
    // Predicated region
    $region22: #{tpu_custom_call.1} parent=1 // pred_check
      _
    $region23: #{tpu_custom_call.1} parent=1 // pred_check_branch
      %42 = sbr.rel (0) target = $region25
    $region24: #{tpu_custom_call.1} parent=1 // pred_region
      _
    $region25: #{tpu_custom_call.1} parent=1 // pred_fallthru
      _
    // Predicated region
    $region26: #{tpu_custom_call.1} parent=1 // pred_check
      _
    $region27: #{tpu_custom_call.1} parent=1 // pred_check_branch
      %44 = sbr.rel (0) target = $region29
    $region28: #{tpu_custom_call.1} parent=1 // pred_region
      %s46 = ssub.s32 512, 512
      %47 = vsyncadd [#allocation7], %s46
      %s48 = sshll.u32 [#allocation6], 4
      %s49 = int_to_ptr.vmem [resolvable:$true] %s48
      %54 = dma.hbm_to_vmem [thread:$0]  %s6, 512, %s49, [#allocation7], 128, 128, 8
    $region29: #{tpu_custom_call.1} parent=1 // pred_fallthru
      _
    // Predicated region
    $region30: #{tpu_custom_call.1} parent=1 // pred_check
      _
    $region31: #{tpu_custom_call.1} parent=1 // pred_check_branch
      %56 = sbr.rel (0) target = $region33
    $region32: #{tpu_custom_call.1} parent=1 // pred_region
      _
    $region33: #{tpu_custom_call.1} parent=1 // pred_fallthru
      _
    // Predicated region
    $region34: #{tpu_custom_call.1} parent=1 // pred_check
      _
    $region35: #{tpu_custom_call.1} parent=1 // pred_check_branch
      %58 = sbr.rel (0) target = $region37
    $region36: #{tpu_custom_call.1} parent=1 // pred_region
      %s60 = ssub.s32 256, 256
      %61 = vsyncadd [#allocation7], %s60
      %s62 = sshll.u32 [#allocation8], 4
      %s63 = int_to_ptr.vmem [resolvable:$true] %s62
      %68 = dma.hbm_to_vmem [thread:$0]  %s8, 256, %s63, [#allocation7], 128, 128, 8
    $region37: #{tpu_custom_call.1} parent=1 // pred_fallthru
      _
    // Predicated region
    $region38: #{tpu_custom_call.1} parent=1 // pred_check
      _
    $region39: #{tpu_custom_call.1} parent=1 // pred_check_branch
      %70 = sbr.rel (0) target = $region41
    $region40: #{tpu_custom_call.1} parent=1 // pred_region
      _
    $region41: #{tpu_custom_call.1} parent=1 // pred_fallthru
      _
    // Predicated region
    $region42: #{tpu_custom_call.1} parent=1 // pred_check
      _
    $region43: #{tpu_custom_call.1} parent=1 // pred_check_branch
      %72 = sbr.rel (0) target = $region45
    $region44: #{tpu_custom_call.1} parent=1 // pred_region
      %s74 = ssub.s32 512, 512
      %75 = vsyncadd [#allocation10], %s74
      %s76 = sshll.u32 [#allocation9], 4
      %s77 = int_to_ptr.vmem [resolvable:$true] %s76
      %82 = dma.hbm_to_vmem [thread:$0]  %s10, 512, %s77, [#allocation10], 128, 128, 8
    $region45: #{tpu_custom_call.1} parent=1 // pred_fallthru
      _
    // Predicated region
    $region46: #{tpu_custom_call.1} parent=1 // pred_check
      _
    $region47: #{tpu_custom_call.1} parent=1 // pred_check_branch
      %84 = sbr.rel (0) target = $region49
    $region48: #{tpu_custom_call.1} parent=1 // pred_region
      _
    $region49: #{tpu_custom_call.1} parent=1 // pred_fallthru
      _
    // Predicated region
    $region50: #{tpu_custom_call.1} parent=1 // pred_check
      _
    $region51: #{tpu_custom_call.1} parent=1 // pred_check_branch
      %86 = sbr.rel (0) target = $region53
    $region52: #{tpu_custom_call.1} parent=1 // pred_region
      %s88 = ssub.s32 4096, 4096
      %89 = vsyncadd [#allocation10], %s88
      %s90 = sshll.u32 [#allocation11], 4
      %s91 = int_to_ptr.vmem [resolvable:$true] %s90
      %96 = dma.hbm_to_vmem [thread:$0]  %s12, 4096, %s91, [#allocation10], 256, 256, 16
    $region53: #{tpu_custom_call.1} parent=1 // pred_fallthru
      _
    // Predicated region
    $region54: #{tpu_custom_call.1} parent=1 // pred_check
      _
    $region55: #{tpu_custom_call.1} parent=1 // pred_check_branch
      %98 = sbr.rel (0) target = $region57
    $region56: #{tpu_custom_call.1} parent=1 // pred_region
      %99 = dma.done [#allocation5], 256
    $region57: #{tpu_custom_call.1} parent=1 // pred_fallthru
      _
    // Predicated region
    $region58: #{tpu_custom_call.1} parent=1 // pred_check
      _
    $region59: #{tpu_custom_call.1} parent=1 // pred_check_branch
      %101 = sbr.rel (0) target = $region61
    $region60: #{tpu_custom_call.1} parent=1 // pred_region
      %102 = dma.done [#allocation7], 512
    $region61: #{tpu_custom_call.1} parent=1 // pred_fallthru
      _
    // Predicated region
    $region62: #{tpu_custom_call.1} parent=1 // pred_check
      _
    $region63: #{tpu_custom_call.1} parent=1 // pred_check_branch
      %104 = sbr.rel (0) target = $region65
    $region64: #{tpu_custom_call.1} parent=1 // pred_region
      %105 = dma.done [#allocation7], 256
    $region65: #{tpu_custom_call.1} parent=1 // pred_fallthru
      _
    // Predicated region
    $region66: #{tpu_custom_call.1} parent=1 // pred_check
      _
    $region67: #{tpu_custom_call.1} parent=1 // pred_check_branch
      %107 = sbr.rel (0) target = $region69
    $region68: #{tpu_custom_call.1} parent=1 // pred_region
      %108 = dma.done [#allocation10], 512
    $region69: #{tpu_custom_call.1} parent=1 // pred_fallthru
      _
    // Predicated region
    $region70: #{tpu_custom_call.1} parent=1 // pred_check
      _
    $region71: #{tpu_custom_call.1} parent=1 // pred_check_branch
      %110 = sbr.rel (0) target = $region73
    $region72: #{tpu_custom_call.1} parent=1 // pred_region
      %111 = dma.done [#allocation10], 4096
    $region73: #{tpu_custom_call.1} parent=1 // pred_fallthru
      _
    %v112 = vld [vmem:[%s0] sm:$0xff]
    %v113 = vld [vmem:[%s0 + $0x8] sm:$0xff]
    %v114 = vld [vmem:[%s0 + $0x10] sm:$0xff]
    %v115 = vld [vmem:[%s0 + $0x18] sm:$0xff]
    %v116 = vld [vmem:[%s0 + $0x20] sm:$0xff]
    %v117 = vld [vmem:[%s0 + $0x28] sm:$0xff]
    %v118 = vld [vmem:[%s0 + $0x30] sm:$0xff]
    %v119 = vld [vmem:[%s0 + $0x38] sm:$0xff]
    %v120 = vld [vmem:[%s0 + $0x40] sm:$0xff]
    %v121 = vld [vmem:[%s0 + $0x48] sm:$0xff]
    %v122 = vld [vmem:[%s0 + $0x50] sm:$0xff]
    %v123 = vld [vmem:[%s0 + $0x58] sm:$0xff]
    %v124 = vld [vmem:[%s0 + $0x60] sm:$0xff]
    %v125 = vld [vmem:[%s0 + $0x68] sm:$0xff]
    %v126 = vld [vmem:[%s0 + $0x70] sm:$0xff]
    %v127 = vld [vmem:[%s0 + $0x78] sm:$0xff]
    %v128 = vld [vmem:[%s3] sm:$0xff]
    %v129 = vld [vmem:[%s3 + $0x8] sm:$0xff]
    %v130 = vld [vmem:[%s3 + $0x10] sm:$0xff]
    %v131 = vld [vmem:[%s3 + $0x18] sm:$0xff]
    %v132 = vld [vmem:[%s2] sm:$0xff]
    %v133 = vld [vmem:[%s2 + $0x8] sm:$0xff]
    %v134 = vld [vmem:[%s2 + $0x10] sm:$0xff]
    %v135 = vld [vmem:[%s2 + $0x18] sm:$0xff]
    %v136 = vld [vmem:[%s2 + $0x20] sm:$0xff]
    %v137 = vld [vmem:[%s2 + $0x28] sm:$0xff]
    %v138 = vld [vmem:[%s2 + $0x30] sm:$0xff]
    %v139 = vld [vmem:[%s2 + $0x38] sm:$0xff]
    %v140 = vld [vmem:[%s2 + $0x40] sm:$0xff]
    %v141 = vld [vmem:[%s2 + $0x48] sm:$0xff]
    %v142 = vld [vmem:[%s2 + $0x50] sm:$0xff]
    %v143 = vld [vmem:[%s2 + $0x58] sm:$0xff]
    %v144 = vld [vmem:[%s2 + $0x60] sm:$0xff]
    %v145 = vld [vmem:[%s2 + $0x68] sm:$0xff]
    %v146 = vld [vmem:[%s2 + $0x70] sm:$0xff]
    %v147 = vld [vmem:[%s2 + $0x78] sm:$0xff]
    %vm148 = vcmask 261120
    %v150 = vsel %vm148, %v112, 0
    %v153 = vsel %vm148, %v113, 0
    %v156 = vsel %vm148, %v114, 0
    %v159 = vsel %vm148, %v115, 0
    %v162 = vsel %vm148, %v116, 0
    %v165 = vsel %vm148, %v117, 0
    %v168 = vsel %vm148, %v118, 0
    %v171 = vsel %vm148, %v119, 0
    %v174 = vsel %vm148, %v120, 0
    %v177 = vsel %vm148, %v121, 0
    %v180 = vsel %vm148, %v122, 0
    %v183 = vsel %vm148, %v123, 0
    %v186 = vsel %vm148, %v124, 0
    %v189 = vsel %vm148, %v125, 0
    %v192 = vsel %vm148, %v126, 0
    %v195 = vsel %vm148, %v127, 0
    %197 = vmatprep.subr.mxu0 0.0
    %198 = vmatpush1.msra.mxu0 0.0
    %199 = vmatprep.subr.mxu0 0.0
    %200 = vmatpush1.msra.mxu0 0.0
    %201 = vmatprep.subr.mxu0 0.0
    %202 = vmatpush1.msra.mxu0 0.0
    %203 = vmatprep.subr.mxu0 0.0
    %204 = vmatpush1.msra.mxu0 0.0
    %205 = vmatprep.subr.mxu0 0.0
    %206 = vmatpush1.msra.mxu0 0.0
    %207 = vmatprep.subr.mxu0 0.0
    %208 = vmatpush1.msra.mxu0 0.0
    %209 = vmatprep.subr.mxu0 0.0
    %210 = vmatpush1.msra.mxu0 0.0
    %211 = vmatprep.subr.mxu0 0.0
    %212 = vmatpush1.msra.mxu0 0.0
    %213 = vmatprep.subr.mxu0 0.0
    %214 = vmatpush1.msra.mxu0 0.0
    %215 = vmatprep.subr.mxu0 0.0
    %216 = vmatpush1.msra.mxu0 0.0
    %217 = vmatprep.subr.mxu0 0.0
    %218 = vmatpush1.msra.mxu0 0.0
    %219 = vmatprep.subr.mxu0 0.0
    %220 = vmatpush1.msra.mxu0 0.0
    %221 = vmatprep.subr.mxu0 0.0
    %222 = vmatpush1.msra.mxu0 %v131
    %223 = vmatprep.subr.mxu0 0.0
    %224 = vmatpush1.msra.mxu0 %v130
    %225 = vmatprep.subr.mxu0 0.0
    %226 = vmatpush1.msra.mxu0 %v129
    %227 = vmatprep.subr.mxu0 0.0
    %228 = vmatpush1.msra.mxu0 %v128
    %229 = vmatprep.subr.mxu0 0.0
    %230 = vmatpush2.msra.mxu0 0.0
    %231 = vmatprep.subr.mxu0 0.0
    %232 = vmatpush2.msra.mxu0 0.0
    %233 = vmatprep.subr.mxu0 0.0
    %234 = vmatpush2.msra.mxu0 0.0
    %235 = vmatprep.subr.mxu0 0.0
    %236 = vmatpush2.msra.mxu0 0.0
    %237 = vmatprep.subr.mxu0 0.0
    %238 = vmatpush2.msra.mxu0 0.0
    %239 = vmatprep.subr.mxu0 0.0
    %240 = vmatpush2.msra.mxu0 0.0
    %241 = vmatprep.subr.mxu0 0.0
    %242 = vmatpush2.msra.mxu0 0.0
    %243 = vmatprep.subr.mxu0 0.0
    %244 = vmatpush2.msra.mxu0 0.0
    %245 = vmatprep.subr.mxu0 0.0
    %246 = vmatpush2.msra.mxu0 0.0
    %247 = vmatprep.subr.mxu0 0.0
    %248 = vmatpush2.msra.mxu0 0.0
    %249 = vmatprep.subr.mxu0 0.0
    %250 = vmatpush2.msra.mxu0 0.0
    %251 = vmatprep.subr.mxu0 0.0
    %252 = vmatpush2.msra.mxu0 0.0
    %253 = vmatprep.subr.mxu0 0.0
    %254 = vmatpush2.msra.mxu0 0.0
    %255 = vmatprep.subr.mxu0 0.0
    %256 = vmatpush2.msra.mxu0 0.0
    %257 = vmatprep.subr.mxu0 0.0
    %258 = vmatpush2.msra.mxu0 0.0
    %259 = vmatprep.subr.mxu0 0.0
    %260 = vmatpush2.msra.mxu0 0.0
    %261 = vmatprep.mubr.f32.mxu0 0.0
    %262 = vmatmul.mubr.f32.gmra.mxu0 %v150
    %v263 = vpop.f32.mrf.mxu0
    %v264 = vadd.f32 0.0, %v263
    %v265 = vpop.f32.mrf.mxu0
    %266 = vmatprep.mubr.f32.mxu0 0.0
    %267 = vmatmul.mubr.f32.gmra.mxu0 %v153
    %v268 = vpop.f32.mrf.mxu0
    %v269 = vadd.f32 0.0, %v268
    %v270 = vpop.f32.mrf.mxu0
    %271 = vmatprep.mubr.f32.mxu0 0.0
    %272 = vmatmul.mubr.f32.gmra.mxu0 %v156
    %v273 = vpop.f32.mrf.mxu0
    %v274 = vadd.f32 0.0, %v273
    %v275 = vpop.f32.mrf.mxu0
    %276 = vmatprep.mubr.f32.mxu0 0.0
    %277 = vmatmul.mubr.f32.gmra.mxu0 %v159
    %v278 = vpop.f32.mrf.mxu0
    %v279 = vadd.f32 0.0, %v278
    %v280 = vpop.f32.mrf.mxu0
    %281 = vmatprep.mubr.f32.mxu0 0.0
    %282 = vmatmul.mubr.f32.gmra.mxu0 %v162
    %v283 = vpop.f32.mrf.mxu0
    %v284 = vadd.f32 0.0, %v283
    %v285 = vpop.f32.mrf.mxu0
    %286 = vmatprep.mubr.f32.mxu0 0.0
    %287 = vmatmul.mubr.f32.gmra.mxu0 %v165
    %v288 = vpop.f32.mrf.mxu0
    %v289 = vadd.f32 0.0, %v288
    %v290 = vpop.f32.mrf.mxu0
    %291 = vmatprep.mubr.f32.mxu0 0.0
    %292 = vmatmul.mubr.f32.gmra.mxu0 %v168
    %v293 = vpop.f32.mrf.mxu0
    %v294 = vadd.f32 0.0, %v293
    %v295 = vpop.f32.mrf.mxu0
    %296 = vmatprep.mubr.f32.mxu0 0.0
    %297 = vmatmul.mubr.f32.gmra.mxu0 %v171
    %v298 = vpop.f32.mrf.mxu0
    %v299 = vadd.f32 0.0, %v298
    %v300 = vpop.f32.mrf.mxu0
    %301 = vmatprep.mubr.f32.mxu0 0.0
    %302 = vmatmul.mubr.f32.gmra.mxu0 %v174
    %v303 = vpop.f32.mrf.mxu0
    %v304 = vadd.f32 0.0, %v303
    %v305 = vpop.f32.mrf.mxu0
    %306 = vmatprep.mubr.f32.mxu0 0.0
    %307 = vmatmul.mubr.f32.gmra.mxu0 %v177
    %v308 = vpop.f32.mrf.mxu0
    %v309 = vadd.f32 0.0, %v308
    %v310 = vpop.f32.mrf.mxu0
    %311 = vmatprep.mubr.f32.mxu0 0.0
    %312 = vmatmul.mubr.f32.gmra.mxu0 %v180
    %v313 = vpop.f32.mrf.mxu0
    %v314 = vadd.f32 0.0, %v313
    %v315 = vpop.f32.mrf.mxu0
    %316 = vmatprep.mubr.f32.mxu0 0.0
    %317 = vmatmul.mubr.f32.gmra.mxu0 %v183
    %v318 = vpop.f32.mrf.mxu0
    %v319 = vadd.f32 0.0, %v318
    %v320 = vpop.f32.mrf.mxu0
    %321 = vmatprep.mubr.f32.mxu0 0.0
    %322 = vmatmul.mubr.f32.gmra.mxu0 %v186
    %v323 = vpop.f32.mrf.mxu0
    %v324 = vadd.f32 0.0, %v323
    %v325 = vpop.f32.mrf.mxu0
    %326 = vmatprep.mubr.f32.mxu0 0.0
    %327 = vmatmul.mubr.f32.gmra.mxu0 %v189
    %v328 = vpop.f32.mrf.mxu0
    %v329 = vadd.f32 0.0, %v328
    %v330 = vpop.f32.mrf.mxu0
    %331 = vmatprep.mubr.f32.mxu0 0.0
    %332 = vmatmul.mubr.f32.gmra.mxu0 %v192
    %v333 = vpop.f32.mrf.mxu0
    %v334 = vadd.f32 0.0, %v333
    %v335 = vpop.f32.mrf.mxu0
    %336 = vmatprep.mubr.f32.mxu0 0.0
    %337 = vmatmul.mubr.f32.gmra.mxu0 %v195
    %v338 = vpop.f32.mrf.mxu0
    %v339 = vadd.f32 0.0, %v338
    %v340 = vpop.f32.mrf.mxu0
    %341 = vdwg.mxu0
    %342 = vmatprep.subr.mxu0 0.0
    %343 = vmatpush1.msra.mxu0 %v339
    %344 = vmatprep.subr.mxu0 0.0
    %345 = vmatpush1.msra.mxu0 %v334
    %346 = vmatprep.subr.mxu0 0.0
    %347 = vmatpush1.msra.mxu0 %v329
    %348 = vmatprep.subr.mxu0 0.0
    %349 = vmatpush1.msra.mxu0 %v324
    %350 = vmatprep.subr.mxu0 0.0
    %351 = vmatpush1.msra.mxu0 %v319
    %352 = vmatprep.subr.mxu0 0.0
    %353 = vmatpush1.msra.mxu0 %v314
    %354 = vmatprep.subr.mxu0 0.0
    %355 = vmatpush1.msra.mxu0 %v309
    %356 = vmatprep.subr.mxu0 0.0
    %357 = vmatpush1.msra.mxu0 %v304
    %358 = vmatprep.subr.mxu0 0.0
    %359 = vmatpush1.msra.mxu0 %v299
    %360 = vmatprep.subr.mxu0 0.0
    %361 = vmatpush1.msra.mxu0 %v294
    %362 = vmatprep.subr.mxu0 0.0
    %363 = vmatpush1.msra.mxu0 %v289
    %364 = vmatprep.subr.mxu0 0.0
    %365 = vmatpush1.msra.mxu0 %v284
    %366 = vmatprep.subr.mxu0 0.0
    %367 = vmatpush1.msra.mxu0 %v279
    %368 = vmatprep.subr.mxu0 0.0
    %369 = vmatpush1.msra.mxu0 %v274
    %370 = vmatprep.subr.mxu0 0.0
    %371 = vmatpush1.msra.mxu0 %v269
    %372 = vmatprep.subr.mxu0 0.0
    %373 = vmatpush1.msra.mxu0 %v264
    %374 = vmatprep.subr.mxu0 0.0
    %375 = vmatpush2.msra.mxu0 0.0
    %376 = vmatprep.subr.mxu0 0.0
    %377 = vmatpush2.msra.mxu0 0.0
    %378 = vmatprep.subr.mxu0 0.0
    %379 = vmatpush2.msra.mxu0 0.0
    %380 = vmatprep.subr.mxu0 0.0
    %381 = vmatpush2.msra.mxu0 0.0
    %382 = vmatprep.subr.mxu0 0.0
    %383 = vmatpush2.msra.mxu0 0.0
    %384 = vmatprep.subr.mxu0 0.0
    %385 = vmatpush2.msra.mxu0 0.0
    %386 = vmatprep.subr.mxu0 0.0
    %387 = vmatpush2.msra.mxu0 0.0
    %388 = vmatprep.subr.mxu0 0.0
    %389 = vmatpush2.msra.mxu0 0.0
    %390 = vmatprep.subr.mxu0 0.0
    %391 = vmatpush2.msra.mxu0 0.0
    %392 = vmatprep.subr.mxu0 0.0
    %393 = vmatpush2.msra.mxu0 0.0
    %394 = vmatprep.subr.mxu0 0.0
    %395 = vmatpush2.msra.mxu0 0.0
    %396 = vmatprep.subr.mxu0 0.0
    %397 = vmatpush2.msra.mxu0 0.0
    %398 = vmatprep.subr.mxu0 0.0
    %399 = vmatpush2.msra.mxu0 0.0
    %400 = vmatprep.subr.mxu0 0.0
    %401 = vmatpush2.msra.mxu0 0.0
    %402 = vmatprep.subr.mxu0 0.0
    %403 = vmatpush2.msra.mxu0 0.0
    %404 = vmatprep.subr.mxu0 0.0
    %405 = vmatpush2.msra.mxu0 0.0
    %406 = vmatprep.mubr.f32.mxu0 0.0
    %407 = vmatmul.mubr.f32.gmra.mxu0 %v132
    %v408 = vpop.f32.mrf.mxu0
    %v409 = vadd.f32 0.0, %v408
    %v410 = vpop.f32.mrf.mxu0
    %411 = vmatprep.mubr.f32.mxu0 0.0
    %412 = vmatmul.mubr.f32.gmra.mxu0 %v133
    %v413 = vpop.f32.mrf.mxu0
    %v414 = vadd.f32 0.0, %v413
    %v415 = vpop.f32.mrf.mxu0
    %416 = vmatprep.mubr.f32.mxu0 0.0
    %417 = vmatmul.mubr.f32.gmra.mxu0 %v134
    %v418 = vpop.f32.mrf.mxu0
    %v419 = vadd.f32 0.0, %v418
    %v420 = vpop.f32.mrf.mxu0
    %421 = vmatprep.mubr.f32.mxu0 0.0
    %422 = vmatmul.mubr.f32.gmra.mxu0 %v135
    %v423 = vpop.f32.mrf.mxu0
    %v424 = vadd.f32 0.0, %v423
    %v425 = vpop.f32.mrf.mxu0
    %426 = vmatprep.mubr.f32.mxu0 0.0
    %427 = vmatmul.mubr.f32.gmra.mxu0 %v136
    %v428 = vpop.f32.mrf.mxu0
    %v429 = vadd.f32 0.0, %v428
    %v430 = vpop.f32.mrf.mxu0
    %431 = vmatprep.mubr.f32.mxu0 0.0
    %432 = vmatmul.mubr.f32.gmra.mxu0 %v137
    %v433 = vpop.f32.mrf.mxu0
    %v434 = vadd.f32 0.0, %v433
    %v435 = vpop.f32.mrf.mxu0
    %436 = vmatprep.mubr.f32.mxu0 0.0
    %437 = vmatmul.mubr.f32.gmra.mxu0 %v138
    %v438 = vpop.f32.mrf.mxu0
    %v439 = vadd.f32 0.0, %v438
    %v440 = vpop.f32.mrf.mxu0
    %441 = vmatprep.mubr.f32.mxu0 0.0
    %442 = vmatmul.mubr.f32.gmra.mxu0 %v139
    %v443 = vpop.f32.mrf.mxu0
    %v444 = vadd.f32 0.0, %v443
    %v445 = vpop.f32.mrf.mxu0
    %446 = vmatprep.mubr.f32.mxu0 0.0
    %447 = vmatmul.mubr.f32.gmra.mxu0 %v140
    %v448 = vpop.f32.mrf.mxu0
    %v449 = vadd.f32 0.0, %v448
    %v450 = vpop.f32.mrf.mxu0
    %451 = vmatprep.mubr.f32.mxu0 0.0
    %452 = vmatmul.mubr.f32.gmra.mxu0 %v141
    %v453 = vpop.f32.mrf.mxu0
    %v454 = vadd.f32 0.0, %v453
    %v455 = vpop.f32.mrf.mxu0
    %456 = vmatprep.mubr.f32.mxu0 0.0
    %457 = vmatmul.mubr.f32.gmra.mxu0 %v142
    %v458 = vpop.f32.mrf.mxu0
    %v459 = vadd.f32 0.0, %v458
    %v460 = vpop.f32.mrf.mxu0
    %461 = vmatprep.mubr.f32.mxu0 0.0
    %462 = vmatmul.mubr.f32.gmra.mxu0 %v143
    %v463 = vpop.f32.mrf.mxu0
    %v464 = vadd.f32 0.0, %v463
    %v465 = vpop.f32.mrf.mxu0
    %466 = vmatprep.mubr.f32.mxu0 0.0
    %467 = vmatmul.mubr.f32.gmra.mxu0 %v144
    %v468 = vpop.f32.mrf.mxu0
    %v469 = vadd.f32 0.0, %v468
    %v470 = vpop.f32.mrf.mxu0
    %471 = vmatprep.mubr.f32.mxu0 0.0
    %472 = vmatmul.mubr.f32.gmra.mxu0 %v145
    %v473 = vpop.f32.mrf.mxu0
    %v474 = vadd.f32 0.0, %v473
    %v475 = vpop.f32.mrf.mxu0
    %476 = vmatprep.mubr.f32.mxu0 0.0
    %477 = vmatmul.mubr.f32.gmra.mxu0 %v146
    %v478 = vpop.f32.mrf.mxu0
    %v479 = vadd.f32 0.0, %v478
    %v480 = vpop.f32.mrf.mxu0
    %481 = vmatprep.mubr.f32.mxu0 0.0
    %482 = vmatmul.mubr.f32.gmra.mxu0 %v147
    %v483 = vpop.f32.mrf.mxu0
    %v484 = vadd.f32 0.0, %v483
    %v485 = vpop.f32.mrf.mxu0
    %486 = vdwg.mxu0
    %v487 = vsub.f32 %v112, %v409
    %v488 = vsub.f32 %v113, %v414
    %v489 = vsub.f32 %v114, %v419
    %v490 = vsub.f32 %v115, %v424
    %v491 = vsub.f32 %v116, %v429
    %v492 = vsub.f32 %v117, %v434
    %v493 = vsub.f32 %v118, %v439
    %v494 = vsub.f32 %v119, %v444
    %v495 = vsub.f32 %v120, %v449
    %v496 = vsub.f32 %v121, %v454
    %v497 = vsub.f32 %v122, %v459
    %v498 = vsub.f32 %v123, %v464
    %v499 = vsub.f32 %v124, %v469
    %v500 = vsub.f32 %v125, %v474
    %v501 = vsub.f32 %v126, %v479
    %v502 = vsub.f32 %v127, %v484
    %v503 = vmul.f32 %v487, %v487
    %v504 = vmul.f32 %v488, %v488
    %v505 = vmul.f32 %v489, %v489
    %v506 = vmul.f32 %v490, %v490
    %v507 = vmul.f32 %v491, %v491
    %v508 = vmul.f32 %v492, %v492
    %v509 = vmul.f32 %v493, %v493
    %v510 = vmul.f32 %v494, %v494
    %v511 = vmul.f32 %v495, %v495
    %v512 = vmul.f32 %v496, %v496
    %v513 = vmul.f32 %v497, %v497
    %v514 = vmul.f32 %v498, %v498
    %v515 = vmul.f32 %v499, %v499
    %v516 = vmul.f32 %v500, %v500
    %v517 = vmul.f32 %v501, %v501
    %v518 = vmul.f32 %v502, %v502
    %v520 = vsel %vm148, %v503, 0
    %v523 = vsel %vm148, %v504, 0
    %v526 = vsel %vm148, %v505, 0
    %v529 = vsel %vm148, %v506, 0
    %v532 = vsel %vm148, %v507, 0
    %v535 = vsel %vm148, %v508, 0
    %v538 = vsel %vm148, %v509, 0
    %v541 = vsel %vm148, %v510, 0
    %v544 = vsel %vm148, %v511, 0
    %v547 = vsel %vm148, %v512, 0
    %v550 = vsel %vm148, %v513, 0
    %v553 = vsel %vm148, %v514, 0
    %v556 = vsel %vm148, %v515, 0
    %v559 = vsel %vm148, %v516, 0
    %v562 = vsel %vm148, %v517, 0
    %v565 = vsel %vm148, %v518, 0
    %567 = vmatprep.subr.mxu0 0.0
    %568 = vmatpush1.msra.mxu0 0.0
    %569 = vmatprep.subr.mxu0 0.0
    %570 = vmatpush1.msra.mxu0 0.0
    %571 = vmatprep.subr.mxu0 0.0
    %572 = vmatpush1.msra.mxu0 0.0
    %573 = vmatprep.subr.mxu0 0.0
    %574 = vmatpush1.msra.mxu0 0.0
    %575 = vmatprep.subr.mxu0 0.0
    %576 = vmatpush1.msra.mxu0 0.0
    %577 = vmatprep.subr.mxu0 0.0
    %578 = vmatpush1.msra.mxu0 0.0
    %579 = vmatprep.subr.mxu0 0.0
    %580 = vmatpush1.msra.mxu0 0.0
    %581 = vmatprep.subr.mxu0 0.0
    %582 = vmatpush1.msra.mxu0 0.0
    %583 = vmatprep.subr.mxu0 0.0
    %584 = vmatpush1.msra.mxu0 0.0
    %585 = vmatprep.subr.mxu0 0.0
    %586 = vmatpush1.msra.mxu0 0.0
    %587 = vmatprep.subr.mxu0 0.0
    %588 = vmatpush1.msra.mxu0 0.0
    %589 = vmatprep.subr.mxu0 0.0
    %590 = vmatpush1.msra.mxu0 0.0
    %591 = vmatprep.subr.mxu0 0.0
    %592 = vmatpush1.msra.mxu0 %v131
    %593 = vmatprep.subr.mxu0 0.0
    %594 = vmatpush1.msra.mxu0 %v130
    %595 = vmatprep.subr.mxu0 0.0
    %596 = vmatpush1.msra.mxu0 %v129
    %597 = vmatprep.subr.mxu0 0.0
    %598 = vmatpush1.msra.mxu0 %v128
    %599 = vmatprep.subr.mxu0 0.0
    %600 = vmatpush2.msra.mxu0 0.0
    %601 = vmatprep.subr.mxu0 0.0
    %602 = vmatpush2.msra.mxu0 0.0
    %603 = vmatprep.subr.mxu0 0.0
    %604 = vmatpush2.msra.mxu0 0.0
    %605 = vmatprep.subr.mxu0 0.0
    %606 = vmatpush2.msra.mxu0 0.0
    %607 = vmatprep.subr.mxu0 0.0
    %608 = vmatpush2.msra.mxu0 0.0
    %609 = vmatprep.subr.mxu0 0.0
    %610 = vmatpush2.msra.mxu0 0.0
    %611 = vmatprep.subr.mxu0 0.0
    %612 = vmatpush2.msra.mxu0 0.0
    %613 = vmatprep.subr.mxu0 0.0
    %614 = vmatpush2.msra.mxu0 0.0
    %615 = vmatprep.subr.mxu0 0.0
    %616 = vmatpush2.msra.mxu0 0.0
    %617 = vmatprep.subr.mxu0 0.0
    %618 = vmatpush2.msra.mxu0 0.0
    %619 = vmatprep.subr.mxu0 0.0
    %620 = vmatpush2.msra.mxu0 0.0
    %621 = vmatprep.subr.mxu0 0.0
    %622 = vmatpush2.msra.mxu0 0.0
    %623 = vmatprep.subr.mxu0 0.0
    %624 = vmatpush2.msra.mxu0 0.0
    %625 = vmatprep.subr.mxu0 0.0
    %626 = vmatpush2.msra.mxu0 0.0
    %627 = vmatprep.subr.mxu0 0.0
    %628 = vmatpush2.msra.mxu0 0.0
    %629 = vmatprep.subr.mxu0 0.0
    %630 = vmatpush2.msra.mxu0 0.0
    %631 = vmatprep.mubr.f32.mxu0 0.0
    %632 = vmatmul.mubr.f32.gmra.mxu0 %v520
    %v633 = vpop.f32.mrf.mxu0
    %v634 = vadd.f32 0.0, %v633
    %v635 = vpop.f32.mrf.mxu0
    %636 = vmatprep.mubr.f32.mxu0 0.0
    %637 = vmatmul.mubr.f32.gmra.mxu0 %v523
    %v638 = vpop.f32.mrf.mxu0
    %v639 = vadd.f32 0.0, %v638
    %v640 = vpop.f32.mrf.mxu0
    %641 = vmatprep.mubr.f32.mxu0 0.0
    %642 = vmatmul.mubr.f32.gmra.mxu0 %v526
    %v643 = vpop.f32.mrf.mxu0
    %v644 = vadd.f32 0.0, %v643
    %v645 = vpop.f32.mrf.mxu0
    %646 = vmatprep.mubr.f32.mxu0 0.0
    %647 = vmatmul.mubr.f32.gmra.mxu0 %v529
    %v648 = vpop.f32.mrf.mxu0
    %v649 = vadd.f32 0.0, %v648
    %v650 = vpop.f32.mrf.mxu0
    %651 = vmatprep.mubr.f32.mxu0 0.0
    %652 = vmatmul.mubr.f32.gmra.mxu0 %v532
    %v653 = vpop.f32.mrf.mxu0
    %v654 = vadd.f32 0.0, %v653
    %v655 = vpop.f32.mrf.mxu0
    %656 = vmatprep.mubr.f32.mxu0 0.0
    %657 = vmatmul.mubr.f32.gmra.mxu0 %v535
    %v658 = vpop.f32.mrf.mxu0
    %v659 = vadd.f32 0.0, %v658
    %v660 = vpop.f32.mrf.mxu0
    %661 = vmatprep.mubr.f32.mxu0 0.0
    %662 = vmatmul.mubr.f32.gmra.mxu0 %v538
    %v663 = vpop.f32.mrf.mxu0
    %v664 = vadd.f32 0.0, %v663
    %v665 = vpop.f32.mrf.mxu0
    %666 = vmatprep.mubr.f32.mxu0 0.0
    %667 = vmatmul.mubr.f32.gmra.mxu0 %v541
    %v668 = vpop.f32.mrf.mxu0
    %v669 = vadd.f32 0.0, %v668
    %v670 = vpop.f32.mrf.mxu0
    %671 = vmatprep.mubr.f32.mxu0 0.0
    %672 = vmatmul.mubr.f32.gmra.mxu0 %v544
    %v673 = vpop.f32.mrf.mxu0
    %v674 = vadd.f32 0.0, %v673
    %v675 = vpop.f32.mrf.mxu0
    %676 = vmatprep.mubr.f32.mxu0 0.0
    %677 = vmatmul.mubr.f32.gmra.mxu0 %v547
    %v678 = vpop.f32.mrf.mxu0
    %v679 = vadd.f32 0.0, %v678
    %v680 = vpop.f32.mrf.mxu0
    %681 = vmatprep.mubr.f32.mxu0 0.0
    %682 = vmatmul.mubr.f32.gmra.mxu0 %v550
    %v683 = vpop.f32.mrf.mxu0
    %v684 = vadd.f32 0.0, %v683
    %v685 = vpop.f32.mrf.mxu0
    %686 = vmatprep.mubr.f32.mxu0 0.0
    %687 = vmatmul.mubr.f32.gmra.mxu0 %v553
    %v688 = vpop.f32.mrf.mxu0
    %v689 = vadd.f32 0.0, %v688
    %v690 = vpop.f32.mrf.mxu0
    %691 = vmatprep.mubr.f32.mxu0 0.0
    %692 = vmatmul.mubr.f32.gmra.mxu0 %v556
    %v693 = vpop.f32.mrf.mxu0
    %v694 = vadd.f32 0.0, %v693
    %v695 = vpop.f32.mrf.mxu0
    %696 = vmatprep.mubr.f32.mxu0 0.0
    %697 = vmatmul.mubr.f32.gmra.mxu0 %v559
    %v698 = vpop.f32.mrf.mxu0
    %v699 = vadd.f32 0.0, %v698
    %v700 = vpop.f32.mrf.mxu0
    %701 = vmatprep.mubr.f32.mxu0 0.0
    %702 = vmatmul.mubr.f32.gmra.mxu0 %v562
    %v703 = vpop.f32.mrf.mxu0
    %v704 = vadd.f32 0.0, %v703
    %v705 = vpop.f32.mrf.mxu0
    %706 = vmatprep.mubr.f32.mxu0 0.0
    %707 = vmatmul.mubr.f32.gmra.mxu0 %v565
    %v708 = vpop.f32.mrf.mxu0
    %v709 = vadd.f32 0.0, %v708
    %v710 = vpop.f32.mrf.mxu0
    %711 = vdwg.mxu0
    %712 = vmatprep.subr.mxu0 0.0
    %713 = vmatpush1.msra.mxu0 %v709
    %714 = vmatprep.subr.mxu0 0.0
    %715 = vmatpush1.msra.mxu0 %v704
    %716 = vmatprep.subr.mxu0 0.0
    %717 = vmatpush1.msra.mxu0 %v699
    %718 = vmatprep.subr.mxu0 0.0
    %719 = vmatpush1.msra.mxu0 %v694
    %720 = vmatprep.subr.mxu0 0.0
    %721 = vmatpush1.msra.mxu0 %v689
    %722 = vmatprep.subr.mxu0 0.0
    %723 = vmatpush1.msra.mxu0 %v684
    %724 = vmatprep.subr.mxu0 0.0
    %725 = vmatpush1.msra.mxu0 %v679
    %726 = vmatprep.subr.mxu0 0.0
    %727 = vmatpush1.msra.mxu0 %v674
    %728 = vmatprep.subr.mxu0 0.0
    %729 = vmatpush1.msra.mxu0 %v669
    %730 = vmatprep.subr.mxu0 0.0
    %731 = vmatpush1.msra.mxu0 %v664
    %732 = vmatprep.subr.mxu0 0.0
    %733 = vmatpush1.msra.mxu0 %v659
    %734 = vmatprep.subr.mxu0 0.0
    %735 = vmatpush1.msra.mxu0 %v654
    %736 = vmatprep.subr.mxu0 0.0
    %737 = vmatpush1.msra.mxu0 %v649
    %738 = vmatprep.subr.mxu0 0.0
    %739 = vmatpush1.msra.mxu0 %v644
    %740 = vmatprep.subr.mxu0 0.0
    %741 = vmatpush1.msra.mxu0 %v639
    %742 = vmatprep.subr.mxu0 0.0
    %743 = vmatpush1.msra.mxu0 %v634
    %744 = vmatprep.subr.mxu0 0.0
    %745 = vmatpush2.msra.mxu0 0.0
    %746 = vmatprep.subr.mxu0 0.0
    %747 = vmatpush2.msra.mxu0 0.0
    %748 = vmatprep.subr.mxu0 0.0
    %749 = vmatpush2.msra.mxu0 0.0
    %750 = vmatprep.subr.mxu0 0.0
    %751 = vmatpush2.msra.mxu0 0.0
    %752 = vmatprep.subr.mxu0 0.0
    %753 = vmatpush2.msra.mxu0 0.0
    %754 = vmatprep.subr.mxu0 0.0
    %755 = vmatpush2.msra.mxu0 0.0
    %756 = vmatprep.subr.mxu0 0.0
    %757 = vmatpush2.msra.mxu0 0.0
    %758 = vmatprep.subr.mxu0 0.0
    %759 = vmatpush2.msra.mxu0 0.0
    %760 = vmatprep.subr.mxu0 0.0
    %761 = vmatpush2.msra.mxu0 0.0
    %762 = vmatprep.subr.mxu0 0.0
    %763 = vmatpush2.msra.mxu0 0.0
    %764 = vmatprep.subr.mxu0 0.0
    %765 = vmatpush2.msra.mxu0 0.0
    %766 = vmatprep.subr.mxu0 0.0
    %767 = vmatpush2.msra.mxu0 0.0
    %768 = vmatprep.subr.mxu0 0.0
    %769 = vmatpush2.msra.mxu0 0.0
    %770 = vmatprep.subr.mxu0 0.0
    %771 = vmatpush2.msra.mxu0 0.0
    %772 = vmatprep.subr.mxu0 0.0
    %773 = vmatpush2.msra.mxu0 0.0
    %774 = vmatprep.subr.mxu0 0.0
    %775 = vmatpush2.msra.mxu0 0.0
    %776 = vmatprep.mubr.f32.mxu0 0.0
    %777 = vmatmul.mubr.f32.gmra.mxu0 %v132
    %v778 = vpop.f32.mrf.mxu0
    %v779 = vadd.f32 1e-05, %v778
    %v780 = vpop.f32.mrf.mxu0
    %781 = vmatprep.mubr.f32.mxu0 0.0
    %782 = vmatmul.mubr.f32.gmra.mxu0 %v133
    %v783 = vpop.f32.mrf.mxu0
    %v784 = vadd.f32 1e-05, %v783
    %v785 = vpop.f32.mrf.mxu0
    %786 = vmatprep.mubr.f32.mxu0 0.0
    %787 = vmatmul.mubr.f32.gmra.mxu0 %v134
    %v788 = vpop.f32.mrf.mxu0
    %v789 = vadd.f32 1e-05, %v788
    %v790 = vpop.f32.mrf.mxu0
    %791 = vmatprep.mubr.f32.mxu0 0.0
    %792 = vmatmul.mubr.f32.gmra.mxu0 %v135
    %v793 = vpop.f32.mrf.mxu0
    %v794 = vadd.f32 1e-05, %v793
    %v795 = vpop.f32.mrf.mxu0
    %796 = vmatprep.mubr.f32.mxu0 0.0
    %797 = vmatmul.mubr.f32.gmra.mxu0 %v136
    %v798 = vpop.f32.mrf.mxu0
    %v799 = vadd.f32 1e-05, %v798
    %v800 = vpop.f32.mrf.mxu0
    %801 = vmatprep.mubr.f32.mxu0 0.0
    %802 = vmatmul.mubr.f32.gmra.mxu0 %v137
    %v803 = vpop.f32.mrf.mxu0
    %v804 = vadd.f32 1e-05, %v803
    %v805 = vpop.f32.mrf.mxu0
    %806 = vmatprep.mubr.f32.mxu0 0.0
    %807 = vmatmul.mubr.f32.gmra.mxu0 %v138
    %v808 = vpop.f32.mrf.mxu0
    %v809 = vadd.f32 1e-05, %v808
    %v810 = vpop.f32.mrf.mxu0
    %811 = vmatprep.mubr.f32.mxu0 0.0
    %812 = vmatmul.mubr.f32.gmra.mxu0 %v139
    %v813 = vpop.f32.mrf.mxu0
    %v814 = vadd.f32 1e-05, %v813
    %v815 = vpop.f32.mrf.mxu0
    %816 = vmatprep.mubr.f32.mxu0 0.0
    %817 = vmatmul.mubr.f32.gmra.mxu0 %v140
    %v818 = vpop.f32.mrf.mxu0
    %v819 = vadd.f32 1e-05, %v818
    %v820 = vpop.f32.mrf.mxu0
    %821 = vmatprep.mubr.f32.mxu0 0.0
    %822 = vmatmul.mubr.f32.gmra.mxu0 %v141
    %v823 = vpop.f32.mrf.mxu0
    %v824 = vadd.f32 1e-05, %v823
    %v825 = vpop.f32.mrf.mxu0
    %826 = vmatprep.mubr.f32.mxu0 0.0
    %827 = vmatmul.mubr.f32.gmra.mxu0 %v142
    %v828 = vpop.f32.mrf.mxu0
    %v829 = vadd.f32 1e-05, %v828
    %v830 = vpop.f32.mrf.mxu0
    %831 = vmatprep.mubr.f32.mxu0 0.0
    %832 = vmatmul.mubr.f32.gmra.mxu0 %v143
    %v833 = vpop.f32.mrf.mxu0
    %v834 = vadd.f32 1e-05, %v833
    %v835 = vpop.f32.mrf.mxu0
    %836 = vmatprep.mubr.f32.mxu0 0.0
    %837 = vmatmul.mubr.f32.gmra.mxu0 %v144
    %v838 = vpop.f32.mrf.mxu0
    %v839 = vadd.f32 1e-05, %v838
    %v840 = vpop.f32.mrf.mxu0
    %841 = vmatprep.mubr.f32.mxu0 0.0
    %842 = vmatmul.mubr.f32.gmra.mxu0 %v145
    %v843 = vpop.f32.mrf.mxu0
    %v844 = vadd.f32 1e-05, %v843
    %v845 = vpop.f32.mrf.mxu0
    %846 = vmatprep.mubr.f32.mxu0 0.0
    %847 = vmatmul.mubr.f32.gmra.mxu0 %v146
    %v848 = vpop.f32.mrf.mxu0
    %v849 = vadd.f32 1e-05, %v848
    %v850 = vpop.f32.mrf.mxu0
    %851 = vmatprep.mubr.f32.mxu0 0.0
    %852 = vmatmul.mubr.f32.gmra.mxu0 %v147
    %v853 = vpop.f32.mrf.mxu0
    %v854 = vadd.f32 1e-05, %v853
    %v855 = vpop.f32.mrf.mxu0
    %856 = vdwg.mxu0
    %v857 = vrsqrt.pop %v779
    %v858 = vrsqrt.pop %v784
    %v859 = vrsqrt.pop %v789
    %v860 = vrsqrt.pop %v794
    %v861 = vrsqrt.pop %v799
    %v862 = vrsqrt.pop %v804
    %v863 = vrsqrt.pop %v809
    %v864 = vrsqrt.pop %v814
    %v865 = vrsqrt.pop %v819
    %v866 = vrsqrt.pop %v824
    %v867 = vrsqrt.pop %v829
    %v868 = vrsqrt.pop %v834
    %v869 = vrsqrt.pop %v839
    %v870 = vrsqrt.pop %v844
    %v871 = vrsqrt.pop %v849
    %v872 = vrsqrt.pop %v854
    %v873 = vld [vmem:[%s4] sm:$0x1]
    %v875 = vlaneseq
    %v876 = vshrl.u32 %v875, 7
    %v877 = vsub.s32 0, %v876
    %v878 = vrot.slane %v873, %v877
    %v880 = vmul.f32 %v857, %v878
    %v881 = vmul.f32 %v858, %v878
    %v882 = vmul.f32 %v859, %v878
    %v883 = vmul.f32 %v860, %v878
    %v884 = vmul.f32 %v861, %v878
    %v885 = vmul.f32 %v862, %v878
    %v886 = vmul.f32 %v863, %v878
    %v887 = vmul.f32 %v864, %v878
    %v888 = vmul.f32 %v865, %v878
    %v889 = vmul.f32 %v866, %v878
    %v890 = vmul.f32 %v867, %v878
    %v891 = vmul.f32 %v868, %v878
    %v892 = vmul.f32 %v869, %v878
    %v893 = vmul.f32 %v870, %v878
    %v894 = vmul.f32 %v871, %v878
    %v895 = vmul.f32 %v872, %v878
    %v896 = vmul.f32 %v487, %v880
    %v897 = vmul.f32 %v488, %v881
    %v898 = vmul.f32 %v489, %v882
    %v899 = vmul.f32 %v490, %v883
    %v900 = vmul.f32 %v491, %v884
    %v901 = vmul.f32 %v492, %v885
    %v902 = vmul.f32 %v493, %v886
    %v903 = vmul.f32 %v494, %v887
    %v904 = vmul.f32 %v495, %v888
    %v905 = vmul.f32 %v496, %v889
    %v906 = vmul.f32 %v497, %v890
    %v907 = vmul.f32 %v498, %v891
    %v908 = vmul.f32 %v499, %v892
    %v909 = vmul.f32 %v500, %v893
    %v910 = vmul.f32 %v501, %v894
    %v911 = vmul.f32 %v502, %v895
    %v912 = vld [vmem:[%s5] sm:$0x1]
    %v914 = vlaneseq
    %v915 = vshrl.u32 %v914, 7
    %v916 = vsub.s32 0, %v915
    %v917 = vrot.slane %v912, %v916
    %v919 = vadd.f32 %v896, %v917
    %v920 = vadd.f32 %v897, %v917
    %v921 = vadd.f32 %v898, %v917
    %v922 = vadd.f32 %v899, %v917
    %v923 = vadd.f32 %v900, %v917
    %v924 = vadd.f32 %v901, %v917
    %v925 = vadd.f32 %v902, %v917
    %v926 = vadd.f32 %v903, %v917
    %v927 = vadd.f32 %v904, %v917
    %v928 = vadd.f32 %v905, %v917
    %v929 = vadd.f32 %v906, %v917
    %v930 = vadd.f32 %v907, %v917
    %v931 = vadd.f32 %v908, %v917
    %v932 = vadd.f32 %v909, %v917
    %v933 = vadd.f32 %v910, %v917
    %v934 = vadd.f32 %v911, %v917
    %v935 = vld [vmem:[#allocation6] sm:$0xff]
    %v936 = vld [vmem:[#allocation6 + $0x8] sm:$0xff]
    %v937 = vld [vmem:[#allocation6 + $0x10] sm:$0xff]
    %v938 = vld [vmem:[#allocation6 + $0x18] sm:$0xff]
    %v939 = vld [vmem:[%s7] sm:$0x1]
    %v941 = vlaneseq
    %v942 = vshrl.u32 %v941, 7
    %v943 = vsub.s32 0, %v942
    %v944 = vrot.slane %v939, %v943
    %v947 = vsel %vm148, %v919, 0
    %v950 = vsel %vm148, %v920, 0
    %v953 = vsel %vm148, %v921, 0
    %v956 = vsel %vm148, %v922, 0
    %v959 = vsel %vm148, %v923, 0
    %v962 = vsel %vm148, %v924, 0
    %v965 = vsel %vm148, %v925, 0
    %v968 = vsel %vm148, %v926, 0
    %v971 = vsel %vm148, %v927, 0
    %v974 = vsel %vm148, %v928, 0
    %v977 = vsel %vm148, %v929, 0
    %v980 = vsel %vm148, %v930, 0
    %v983 = vsel %vm148, %v931, 0
    %v986 = vsel %vm148, %v932, 0
    %v989 = vsel %vm148, %v933, 0
    %v992 = vsel %vm148, %v934, 0
    %994 = vmatprep.subr.mxu0 0.0
    %995 = vmatpush1.msra.mxu0 0.0
    %996 = vmatprep.subr.mxu0 0.0
    %997 = vmatpush1.msra.mxu0 0.0
    %998 = vmatprep.subr.mxu0 0.0
    %999 = vmatpush1.msra.mxu0 0.0
    %1000 = vmatprep.subr.mxu0 0.0
    %1001 = vmatpush1.msra.mxu0 0.0
    %1002 = vmatprep.subr.mxu0 0.0
    %1003 = vmatpush1.msra.mxu0 0.0
    %1004 = vmatprep.subr.mxu0 0.0
    %1005 = vmatpush1.msra.mxu0 0.0
    %1006 = vmatprep.subr.mxu0 0.0
    %1007 = vmatpush1.msra.mxu0 0.0
    %1008 = vmatprep.subr.mxu0 0.0
    %1009 = vmatpush1.msra.mxu0 0.0
    %1010 = vmatprep.subr.mxu0 0.0
    %1011 = vmatpush1.msra.mxu0 0.0
    %1012 = vmatprep.subr.mxu0 0.0
    %1013 = vmatpush1.msra.mxu0 0.0
    %1014 = vmatprep.subr.mxu0 0.0
    %1015 = vmatpush1.msra.mxu0 0.0
    %1016 = vmatprep.subr.mxu0 0.0
    %1017 = vmatpush1.msra.mxu0 0.0
    %1018 = vmatprep.subr.mxu0 0.0
    %1019 = vmatpush1.msra.mxu0 %v938
    %1020 = vmatprep.subr.mxu0 0.0
    %1021 = vmatpush1.msra.mxu0 %v937
    %1022 = vmatprep.subr.mxu0 0.0
    %1023 = vmatpush1.msra.mxu0 %v936
    %1024 = vmatprep.subr.mxu0 0.0
    %1025 = vmatpush1.msra.mxu0 %v935
    %1026 = vmatprep.subr.mxu0 0.0
    %1027 = vmatpush2.msra.mxu0 0.0
    %1028 = vmatprep.subr.mxu0 0.0
    %1029 = vmatpush2.msra.mxu0 0.0
    %1030 = vmatprep.subr.mxu0 0.0
    %1031 = vmatpush2.msra.mxu0 0.0
    %1032 = vmatprep.subr.mxu0 0.0
    %1033 = vmatpush2.msra.mxu0 0.0
    %1034 = vmatprep.subr.mxu0 0.0
    %1035 = vmatpush2.msra.mxu0 0.0
    %1036 = vmatprep.subr.mxu0 0.0
    %1037 = vmatpush2.msra.mxu0 0.0
    %1038 = vmatprep.subr.mxu0 0.0
    %1039 = vmatpush2.msra.mxu0 0.0
    %1040 = vmatprep.subr.mxu0 0.0
    %1041 = vmatpush2.msra.mxu0 0.0
    %1042 = vmatprep.subr.mxu0 0.0
    %1043 = vmatpush2.msra.mxu0 0.0
    %1044 = vmatprep.subr.mxu0 0.0
    %1045 = vmatpush2.msra.mxu0 0.0
    %1046 = vmatprep.subr.mxu0 0.0
    %1047 = vmatpush2.msra.mxu0 0.0
    %1048 = vmatprep.subr.mxu0 0.0
    %1049 = vmatpush2.msra.mxu0 0.0
    %1050 = vmatprep.subr.mxu0 0.0
    %1051 = vmatpush2.msra.mxu0 0.0
    %1052 = vmatprep.subr.mxu0 0.0
    %1053 = vmatpush2.msra.mxu0 0.0
    %1054 = vmatprep.subr.mxu0 0.0
    %1055 = vmatpush2.msra.mxu0 0.0
    %1056 = vmatprep.subr.mxu0 0.0
    %1057 = vmatpush2.msra.mxu0 0.0
    %1058 = vmatprep.mubr.f32.mxu0 0.0
    %1059 = vmatmul.mubr.f32.gmra.mxu0 %v947
    %v1060 = vpop.f32.mrf.mxu0
    %v1061 = vadd.f32 %v944, %v1060
    %v1062 = vpop.f32.mrf.mxu0
    %1063 = vmatprep.mubr.f32.mxu0 0.0
    %1064 = vmatmul.mubr.f32.gmra.mxu0 %v950
    %v1065 = vpop.f32.mrf.mxu0
    %v1066 = vadd.f32 %v944, %v1065
    %v1067 = vpop.f32.mrf.mxu0
    %1068 = vmatprep.mubr.f32.mxu0 0.0
    %1069 = vmatmul.mubr.f32.gmra.mxu0 %v953
    %v1070 = vpop.f32.mrf.mxu0
    %v1071 = vadd.f32 %v944, %v1070
    %v1072 = vpop.f32.mrf.mxu0
    %1073 = vmatprep.mubr.f32.mxu0 0.0
    %1074 = vmatmul.mubr.f32.gmra.mxu0 %v956
    %v1075 = vpop.f32.mrf.mxu0
    %v1076 = vadd.f32 %v944, %v1075
    %v1077 = vpop.f32.mrf.mxu0
    %1078 = vmatprep.mubr.f32.mxu0 0.0
    %1079 = vmatmul.mubr.f32.gmra.mxu0 %v959
    %v1080 = vpop.f32.mrf.mxu0
    %v1081 = vadd.f32 %v944, %v1080
    %v1082 = vpop.f32.mrf.mxu0
    %1083 = vmatprep.mubr.f32.mxu0 0.0
    %1084 = vmatmul.mubr.f32.gmra.mxu0 %v962
    %v1085 = vpop.f32.mrf.mxu0
    %v1086 = vadd.f32 %v944, %v1085
    %v1087 = vpop.f32.mrf.mxu0
    %1088 = vmatprep.mubr.f32.mxu0 0.0
    %1089 = vmatmul.mubr.f32.gmra.mxu0 %v965
    %v1090 = vpop.f32.mrf.mxu0
    %v1091 = vadd.f32 %v944, %v1090
    %v1092 = vpop.f32.mrf.mxu0
    %1093 = vmatprep.mubr.f32.mxu0 0.0
    %1094 = vmatmul.mubr.f32.gmra.mxu0 %v968
    %v1095 = vpop.f32.mrf.mxu0
    %v1096 = vadd.f32 %v944, %v1095
    %v1097 = vpop.f32.mrf.mxu0
    %1098 = vmatprep.mubr.f32.mxu0 0.0
    %1099 = vmatmul.mubr.f32.gmra.mxu0 %v971
    %v1100 = vpop.f32.mrf.mxu0
    %v1101 = vadd.f32 %v944, %v1100
    %v1102 = vpop.f32.mrf.mxu0
    %1103 = vmatprep.mubr.f32.mxu0 0.0
    %1104 = vmatmul.mubr.f32.gmra.mxu0 %v974
    %v1105 = vpop.f32.mrf.mxu0
    %v1106 = vadd.f32 %v944, %v1105
    %v1107 = vpop.f32.mrf.mxu0
    %1108 = vmatprep.mubr.f32.mxu0 0.0
    %1109 = vmatmul.mubr.f32.gmra.mxu0 %v977
    %v1110 = vpop.f32.mrf.mxu0
    %v1111 = vadd.f32 %v944, %v1110
    %v1112 = vpop.f32.mrf.mxu0
    %1113 = vmatprep.mubr.f32.mxu0 0.0
    %1114 = vmatmul.mubr.f32.gmra.mxu0 %v980
    %v1115 = vpop.f32.mrf.mxu0
    %v1116 = vadd.f32 %v944, %v1115
    %v1117 = vpop.f32.mrf.mxu0
    %1118 = vmatprep.mubr.f32.mxu0 0.0
    %1119 = vmatmul.mubr.f32.gmra.mxu0 %v983
    %v1120 = vpop.f32.mrf.mxu0
    %v1121 = vadd.f32 %v944, %v1120
    %v1122 = vpop.f32.mrf.mxu0
    %1123 = vmatprep.mubr.f32.mxu0 0.0
    %1124 = vmatmul.mubr.f32.gmra.mxu0 %v986
    %v1125 = vpop.f32.mrf.mxu0
    %v1126 = vadd.f32 %v944, %v1125
    %v1127 = vpop.f32.mrf.mxu0
    %1128 = vmatprep.mubr.f32.mxu0 0.0
    %1129 = vmatmul.mubr.f32.gmra.mxu0 %v989
    %v1130 = vpop.f32.mrf.mxu0
    %v1131 = vadd.f32 %v944, %v1130
    %v1132 = vpop.f32.mrf.mxu0
    %1133 = vmatprep.mubr.f32.mxu0 0.0
    %1134 = vmatmul.mubr.f32.gmra.mxu0 %v992
    %v1135 = vpop.f32.mrf.mxu0
    %v1136 = vadd.f32 %v944, %v1135
    %v1137 = vpop.f32.mrf.mxu0
    %1138 = vdwg.mxu0
    %v1139 = vld [vmem:[#allocation4] sm:$0xff]
    %v1140 = vld [vmem:[#allocation4 + $0x8] sm:$0xff]
    %v1141 = vld [vmem:[#allocation8] sm:$0xff]
    %v1142 = vld [vmem:[#allocation8 + $0x8] sm:$0xff]
    %v1143 = vld [vmem:[%s9] sm:$0x1]
    %v1145 = vlaneseq
    %v1146 = vshrl.u32 %v1145, 7
    %v1147 = vsub.s32 0, %v1146
    %v1148 = vrot.slane %v1143, %v1147
    %vm1150 = vcmask 130048
    %v1152 = vsel %vm1150, %v1139, 0
    %v1155 = vsel %vm1150, %v1140, 0
    %1157 = vmatprep.subr.mxu0 0.0
    %1158 = vmatpush1.msra.mxu0 0.0
    %1159 = vmatprep.subr.mxu0 0.0
    %1160 = vmatpush1.msra.mxu0 0.0
    %1161 = vmatprep.subr.mxu0 0.0
    %1162 = vmatpush1.msra.mxu0 0.0
    %1163 = vmatprep.subr.mxu0 0.0
    %1164 = vmatpush1.msra.mxu0 0.0
    %1165 = vmatprep.subr.mxu0 0.0
    %1166 = vmatpush1.msra.mxu0 0.0
    %1167 = vmatprep.subr.mxu0 0.0
    %1168 = vmatpush1.msra.mxu0 0.0
    %1169 = vmatprep.subr.mxu0 0.0
    %1170 = vmatpush1.msra.mxu0 0.0
    %1171 = vmatprep.subr.mxu0 0.0
    %1172 = vmatpush1.msra.mxu0 0.0
    %1173 = vmatprep.subr.mxu0 0.0
    %1174 = vmatpush1.msra.mxu0 0.0
    %1175 = vmatprep.subr.mxu0 0.0
    %1176 = vmatpush1.msra.mxu0 0.0
    %1177 = vmatprep.subr.mxu0 0.0
    %1178 = vmatpush1.msra.mxu0 0.0
    %1179 = vmatprep.subr.mxu0 0.0
    %1180 = vmatpush1.msra.mxu0 0.0
    %1181 = vmatprep.subr.mxu0 0.0
    %1182 = vmatpush1.msra.mxu0 0.0
    %1183 = vmatprep.subr.mxu0 0.0
    %1184 = vmatpush1.msra.mxu0 0.0
    %1185 = vmatprep.subr.mxu0 0.0
    %1186 = vmatpush1.msra.mxu0 %v1142
    %1187 = vmatprep.subr.mxu0 0.0
    %1188 = vmatpush1.msra.mxu0 %v1141
    %1189 = vmatprep.subr.mxu0 0.0
    %1190 = vmatpush2.msra.mxu0 0.0
    %1191 = vmatprep.subr.mxu0 0.0
    %1192 = vmatpush2.msra.mxu0 0.0
    %1193 = vmatprep.subr.mxu0 0.0
    %1194 = vmatpush2.msra.mxu0 0.0
    %1195 = vmatprep.subr.mxu0 0.0
    %1196 = vmatpush2.msra.mxu0 0.0
    %1197 = vmatprep.subr.mxu0 0.0
    %1198 = vmatpush2.msra.mxu0 0.0
    %1199 = vmatprep.subr.mxu0 0.0
    %1200 = vmatpush2.msra.mxu0 0.0
    %1201 = vmatprep.subr.mxu0 0.0
    %1202 = vmatpush2.msra.mxu0 0.0
    %1203 = vmatprep.subr.mxu0 0.0
    %1204 = vmatpush2.msra.mxu0 0.0
    %1205 = vmatprep.subr.mxu0 0.0
    %1206 = vmatpush2.msra.mxu0 0.0
    %1207 = vmatprep.subr.mxu0 0.0
    %1208 = vmatpush2.msra.mxu0 0.0
    %1209 = vmatprep.subr.mxu0 0.0
    %1210 = vmatpush2.msra.mxu0 0.0
    %1211 = vmatprep.subr.mxu0 0.0
    %1212 = vmatpush2.msra.mxu0 0.0
    %1213 = vmatprep.subr.mxu0 0.0
    %1214 = vmatpush2.msra.mxu0 0.0
    %1215 = vmatprep.subr.mxu0 0.0
    %1216 = vmatpush2.msra.mxu0 0.0
    %1217 = vmatprep.subr.mxu0 0.0
    %1218 = vmatpush2.msra.mxu0 0.0
    %1219 = vmatprep.subr.mxu0 0.0
    %1220 = vmatpush2.msra.mxu0 0.0
    %1221 = vmatprep.mubr.f32.mxu0 0.0
    %1222 = vmatmul.mubr.f32.gmra.mxu0 %v1152
    %v1223 = vpop.f32.mrf.mxu0
    %v1224 = vadd.f32 %v1148, %v1223
    %v1225 = vpop.f32.mrf.mxu0
    %1226 = vmatprep.mubr.f32.mxu0 0.0
    %1227 = vmatmul.mubr.f32.gmra.mxu0 %v1155
    %v1228 = vpop.f32.mrf.mxu0
    %v1229 = vadd.f32 %v1148, %v1228
    %v1230 = vpop.f32.mrf.mxu0
    %1231 = vdwg.mxu0
    %1240 = vrot.lane.b32.xlu0 %v1061, 96
    %v1241 = vpop.permute.xlu0 %1240
    %1242 = vrot.lane.b32.xlu0 %v1066, 96
    %v1243 = vpop.permute.xlu0 %1242
    %1244 = vrot.lane.b32.xlu0 %v1071, 96
    %v1245 = vpop.permute.xlu0 %1244
    %1246 = vrot.lane.b32.xlu0 %v1076, 96
    %v1247 = vpop.permute.xlu0 %1246
    %1248 = vrot.lane.b32.xlu0 %v1081, 96
    %v1249 = vpop.permute.xlu0 %1248
    %1250 = vrot.lane.b32.xlu0 %v1086, 96
    %v1251 = vpop.permute.xlu0 %1250
    %1252 = vrot.lane.b32.xlu0 %v1091, 96
    %v1253 = vpop.permute.xlu0 %1252
    %1254 = vrot.lane.b32.xlu0 %v1096, 96
    %v1255 = vpop.permute.xlu0 %1254
    %1264 = vst.msk [vmem:[#allocation2] sm:$0xff] %vm148, %v1241
    %1265 = vst.msk [vmem:[#allocation2 + $0x8] sm:$0xff] %vm148, %v1243
    %1266 = vst.msk [vmem:[#allocation2 + $0x10] sm:$0xff] %vm148, %v1245
    %1267 = vst.msk [vmem:[#allocation2 + $0x18] sm:$0xff] %vm148, %v1247
    %1268 = vst.msk [vmem:[#allocation2 + $0x20] sm:$0xff] %vm148, %v1249
    %1269 = vst.msk [vmem:[#allocation2 + $0x28] sm:$0xff] %vm148, %v1251
    %1270 = vst.msk [vmem:[#allocation2 + $0x30] sm:$0xff] %vm148, %v1253
    %1271 = vst.msk [vmem:[#allocation2 + $0x38] sm:$0xff] %vm148, %v1255
    %1272 = vst.msk [vmem:[#allocation2 + $0x40] sm:$0xff] %vm148, %v1224
    %1273 = vst.msk [vmem:[#allocation2 + $0x48] sm:$0xff] %vm148, 0.0
    %1274 = vst.msk [vmem:[#allocation2 + $0x50] sm:$0xff] %vm148, 0.0
    %1275 = vst.msk [vmem:[#allocation2 + $0x58] sm:$0xff] %vm148, 0.0
    %1276 = vst.msk [vmem:[#allocation2 + $0x60] sm:$0xff] %vm148, 0.0
    %1277 = vst.msk [vmem:[#allocation2 + $0x68] sm:$0xff] %vm148, 0.0
    %1278 = vst.msk [vmem:[#allocation2 + $0x70] sm:$0xff] %vm148, 0.0
    %1279 = vst.msk [vmem:[#allocation2 + $0x78] sm:$0xff] %vm148, 0.0
    %1280 = vrot.lane.b32.xlu0 %v1061, 64
    %v1281 = vpop.permute.xlu0 %1280
    %1282 = vrot.lane.b32.xlu0 %v1066, 64
    %v1283 = vpop.permute.xlu0 %1282
    %1284 = vrot.lane.b32.xlu0 %v1071, 64
    %v1285 = vpop.permute.xlu0 %1284
    %1286 = vrot.lane.b32.xlu0 %v1076, 64
    %v1287 = vpop.permute.xlu0 %1286
    %1288 = vrot.lane.b32.xlu0 %v1081, 64
    %v1289 = vpop.permute.xlu0 %1288
    %1290 = vrot.lane.b32.xlu0 %v1086, 64
    %v1291 = vpop.permute.xlu0 %1290
    %1292 = vrot.lane.b32.xlu0 %v1091, 64
    %v1293 = vpop.permute.xlu0 %1292
    %1294 = vrot.lane.b32.xlu0 %v1096, 64
    %v1295 = vpop.permute.xlu0 %1294
    %1304 = vst.msk [vmem:[#allocation3] sm:$0xff] %vm148, %v1281
    %1305 = vst.msk [vmem:[#allocation3 + $0x8] sm:$0xff] %vm148, %v1283
    %1306 = vst.msk [vmem:[#allocation3 + $0x10] sm:$0xff] %vm148, %v1285
    %1307 = vst.msk [vmem:[#allocation3 + $0x18] sm:$0xff] %vm148, %v1287
    %1308 = vst.msk [vmem:[#allocation3 + $0x20] sm:$0xff] %vm148, %v1289
    %1309 = vst.msk [vmem:[#allocation3 + $0x28] sm:$0xff] %vm148, %v1291
    %1310 = vst.msk [vmem:[#allocation3 + $0x30] sm:$0xff] %vm148, %v1293
    %1311 = vst.msk [vmem:[#allocation3 + $0x38] sm:$0xff] %vm148, %v1295
    %1313 = vrot.lane.b32.xlu0 %v1224, 96
    %v1314 = vpop.permute.xlu0 %1313
    %1316 = vst.msk [vmem:[#allocation3 + $0x40] sm:$0xff] %vm148, %v1314
    %1317 = vst.msk [vmem:[#allocation3 + $0x48] sm:$0xff] %vm148, 0.0
    %1318 = vst.msk [vmem:[#allocation3 + $0x50] sm:$0xff] %vm148, 0.0
    %1319 = vst.msk [vmem:[#allocation3 + $0x58] sm:$0xff] %vm148, 0.0
    %1320 = vst.msk [vmem:[#allocation3 + $0x60] sm:$0xff] %vm148, 0.0
    %1321 = vst.msk [vmem:[#allocation3 + $0x68] sm:$0xff] %vm148, 0.0
    %1322 = vst.msk [vmem:[#allocation3 + $0x70] sm:$0xff] %vm148, 0.0
    %1323 = vst.msk [vmem:[#allocation3 + $0x78] sm:$0xff] %vm148, 0.0
    %1332 = vrot.lane.b32.xlu0 %v1101, 96
    %v1333 = vpop.permute.xlu0 %1332
    %1334 = vrot.lane.b32.xlu0 %v1106, 96
    %v1335 = vpop.permute.xlu0 %1334
    %1336 = vrot.lane.b32.xlu0 %v1111, 96
    %v1337 = vpop.permute.xlu0 %1336
    %1338 = vrot.lane.b32.xlu0 %v1116, 96
    %v1339 = vpop.permute.xlu0 %1338
    %1340 = vrot.lane.b32.xlu0 %v1121, 96
    %v1341 = vpop.permute.xlu0 %1340
    %1342 = vrot.lane.b32.xlu0 %v1126, 96
    %v1343 = vpop.permute.xlu0 %1342
    %1344 = vrot.lane.b32.xlu0 %v1131, 96
    %v1345 = vpop.permute.xlu0 %1344
    %1346 = vrot.lane.b32.xlu0 %v1136, 96
    %v1347 = vpop.permute.xlu0 %1346
    %1356 = vst.msk [vmem:[#allocation2 + $0x80] sm:$0xff] %vm148, %v1333
    %1357 = vst.msk [vmem:[#allocation2 + $0x88] sm:$0xff] %vm148, %v1335
    %1358 = vst.msk [vmem:[#allocation2 + $0x90] sm:$0xff] %vm148, %v1337
    %1359 = vst.msk [vmem:[#allocation2 + $0x98] sm:$0xff] %vm148, %v1339
    %1360 = vst.msk [vmem:[#allocation2 + $0xa0] sm:$0xff] %vm148, %v1341
    %1361 = vst.msk [vmem:[#allocation2 + $0xa8] sm:$0xff] %vm148, %v1343
    %1362 = vst.msk [vmem:[#allocation2 + $0xb0] sm:$0xff] %vm148, %v1345
    %1363 = vst.msk [vmem:[#allocation2 + $0xb8] sm:$0xff] %vm148, %v1347
    %1364 = vst.msk [vmem:[#allocation2 + $0xc0] sm:$0xff] %vm148, %v1229
    %1365 = vst.msk [vmem:[#allocation2 + $0xc8] sm:$0xff] %vm148, 0.0
    %1366 = vst.msk [vmem:[#allocation2 + $0xd0] sm:$0xff] %vm148, 0.0
    %1367 = vst.msk [vmem:[#allocation2 + $0xd8] sm:$0xff] %vm148, 0.0
    %1368 = vst.msk [vmem:[#allocation2 + $0xe0] sm:$0xff] %vm148, 0.0
    %1369 = vst.msk [vmem:[#allocation2 + $0xe8] sm:$0xff] %vm148, 0.0
    %1370 = vst.msk [vmem:[#allocation2 + $0xf0] sm:$0xff] %vm148, 0.0
    %1371 = vst.msk [vmem:[#allocation2 + $0xf8] sm:$0xff] %vm148, 0.0
    %1372 = vrot.lane.b32.xlu0 %v1101, 64
    %v1373 = vpop.permute.xlu0 %1372
    %1374 = vrot.lane.b32.xlu0 %v1106, 64
    %v1375 = vpop.permute.xlu0 %1374
    %1376 = vrot.lane.b32.xlu0 %v1111, 64
    %v1377 = vpop.permute.xlu0 %1376
    %1378 = vrot.lane.b32.xlu0 %v1116, 64
    %v1379 = vpop.permute.xlu0 %1378
    %1380 = vrot.lane.b32.xlu0 %v1121, 64
    %v1381 = vpop.permute.xlu0 %1380
    %1382 = vrot.lane.b32.xlu0 %v1126, 64
    %v1383 = vpop.permute.xlu0 %1382
    %1384 = vrot.lane.b32.xlu0 %v1131, 64
    %v1385 = vpop.permute.xlu0 %1384
    %1386 = vrot.lane.b32.xlu0 %v1136, 64
    %v1387 = vpop.permute.xlu0 %1386
    %1396 = vst.msk [vmem:[#allocation3 + $0x80] sm:$0xff] %vm148, %v1373
    %1397 = vst.msk [vmem:[#allocation3 + $0x88] sm:$0xff] %vm148, %v1375
    %1398 = vst.msk [vmem:[#allocation3 + $0x90] sm:$0xff] %vm148, %v1377
    %1399 = vst.msk [vmem:[#allocation3 + $0x98] sm:$0xff] %vm148, %v1379
    %1400 = vst.msk [vmem:[#allocation3 + $0xa0] sm:$0xff] %vm148, %v1381
    %1401 = vst.msk [vmem:[#allocation3 + $0xa8] sm:$0xff] %vm148, %v1383
    %1402 = vst.msk [vmem:[#allocation3 + $0xb0] sm:$0xff] %vm148, %v1385
    %1403 = vst.msk [vmem:[#allocation3 + $0xb8] sm:$0xff] %vm148, %v1387
    %1405 = vrot.lane.b32.xlu0 %v1229, 96
    %v1406 = vpop.permute.xlu0 %1405
    %1408 = vst.msk [vmem:[#allocation3 + $0xc0] sm:$0xff] %vm148, %v1406
    %1409 = vst.msk [vmem:[#allocation3 + $0xc8] sm:$0xff] %vm148, 0.0
    %1410 = vst.msk [vmem:[#allocation3 + $0xd0] sm:$0xff] %vm148, 0.0
    %1411 = vst.msk [vmem:[#allocation3 + $0xd8] sm:$0xff] %vm148, 0.0
    %1412 = vst.msk [vmem:[#allocation3 + $0xe0] sm:$0xff] %vm148, 0.0
    %1413 = vst.msk [vmem:[#allocation3 + $0xe8] sm:$0xff] %vm148, 0.0
    %1414 = vst.msk [vmem:[#allocation3 + $0xf0] sm:$0xff] %vm148, 0.0
    %1415 = vst.msk [vmem:[#allocation3 + $0xf8] sm:$0xff] %vm148, 0.0
    %v1416 = vld [vmem:[#allocation2] sm:$0xff]
    %v1417 = vld [vmem:[#allocation2 + $0x8] sm:$0xff]
    %v1418 = vld [vmem:[#allocation2 + $0x10] sm:$0xff]
    %v1419 = vld [vmem:[#allocation2 + $0x18] sm:$0xff]
    %v1420 = vld [vmem:[#allocation2 + $0x20] sm:$0xff]
    %v1421 = vld [vmem:[#allocation2 + $0x28] sm:$0xff]
    %v1422 = vld [vmem:[#allocation2 + $0x30] sm:$0xff]
    %v1423 = vld [vmem:[#allocation2 + $0x38] sm:$0xff]
    %v1424 = vld [vmem:[#allocation2 + $0x40] sm:$0xff]
    %v1425 = vld [vmem:[#allocation2 + $0x48] sm:$0xff]
    %v1426 = vld [vmem:[#allocation2 + $0x50] sm:$0xff]
    %v1427 = vld [vmem:[#allocation2 + $0x58] sm:$0xff]
    %v1428 = vld [vmem:[#allocation2 + $0x60] sm:$0xff]
    %v1429 = vld [vmem:[#allocation2 + $0x68] sm:$0xff]
    %v1430 = vld [vmem:[#allocation2 + $0x70] sm:$0xff]
    %v1431 = vld [vmem:[#allocation2 + $0x78] sm:$0xff]
    %v1432 = vld [vmem:[#allocation2 + $0x80] sm:$0xff]
    %v1433 = vld [vmem:[#allocation2 + $0x88] sm:$0xff]
    %v1434 = vld [vmem:[#allocation2 + $0x90] sm:$0xff]
    %v1435 = vld [vmem:[#allocation2 + $0x98] sm:$0xff]
    %v1436 = vld [vmem:[#allocation2 + $0xa0] sm:$0xff]
    %v1437 = vld [vmem:[#allocation2 + $0xa8] sm:$0xff]
    %v1438 = vld [vmem:[#allocation2 + $0xb0] sm:$0xff]
    %v1439 = vld [vmem:[#allocation2 + $0xb8] sm:$0xff]
    %v1440 = vld [vmem:[#allocation2 + $0xc0] sm:$0xff]
    %v1441 = vld [vmem:[#allocation2 + $0xc8] sm:$0xff]
    %v1442 = vld [vmem:[#allocation2 + $0xd0] sm:$0xff]
    %v1443 = vld [vmem:[#allocation2 + $0xd8] sm:$0xff]
    %v1444 = vld [vmem:[#allocation2 + $0xe0] sm:$0xff]
    %v1445 = vld [vmem:[#allocation2 + $0xe8] sm:$0xff]
    %v1446 = vld [vmem:[#allocation2 + $0xf0] sm:$0xff]
    %v1447 = vld [vmem:[#allocation2 + $0xf8] sm:$0xff]
    %v1448 = vld [vmem:[#allocation3] sm:$0xff]
    %v1449 = vld [vmem:[#allocation3 + $0x8] sm:$0xff]
    %v1450 = vld [vmem:[#allocation3 + $0x10] sm:$0xff]
    %v1451 = vld [vmem:[#allocation3 + $0x18] sm:$0xff]
    %v1452 = vld [vmem:[#allocation3 + $0x20] sm:$0xff]
    %v1453 = vld [vmem:[#allocation3 + $0x28] sm:$0xff]
    %v1454 = vld [vmem:[#allocation3 + $0x30] sm:$0xff]
    %v1455 = vld [vmem:[#allocation3 + $0x38] sm:$0xff]
    %v1456 = vld [vmem:[#allocation3 + $0x40] sm:$0xff]
    %v1457 = vld [vmem:[#allocation3 + $0x48] sm:$0xff]
    %v1458 = vld [vmem:[#allocation3 + $0x50] sm:$0xff]
    %v1459 = vld [vmem:[#allocation3 + $0x58] sm:$0xff]
    %v1460 = vld [vmem:[#allocation3 + $0x60] sm:$0xff]
    %v1461 = vld [vmem:[#allocation3 + $0x68] sm:$0xff]
    %v1462 = vld [vmem:[#allocation3 + $0x70] sm:$0xff]
    %v1463 = vld [vmem:[#allocation3 + $0x78] sm:$0xff]
    %v1464 = vld [vmem:[#allocation3 + $0x80] sm:$0xff]
    %v1465 = vld [vmem:[#allocation3 + $0x88] sm:$0xff]
    %v1466 = vld [vmem:[#allocation3 + $0x90] sm:$0xff]
    %v1467 = vld [vmem:[#allocation3 + $0x98] sm:$0xff]
    %v1468 = vld [vmem:[#allocation3 + $0xa0] sm:$0xff]
    %v1469 = vld [vmem:[#allocation3 + $0xa8] sm:$0xff]
    %v1470 = vld [vmem:[#allocation3 + $0xb0] sm:$0xff]
    %v1471 = vld [vmem:[#allocation3 + $0xb8] sm:$0xff]
    %v1472 = vld [vmem:[#allocation3 + $0xc0] sm:$0xff]
    %v1473 = vld [vmem:[#allocation3 + $0xc8] sm:$0xff]
    %v1474 = vld [vmem:[#allocation3 + $0xd0] sm:$0xff]
    %v1475 = vld [vmem:[#allocation3 + $0xd8] sm:$0xff]
    %v1476 = vld [vmem:[#allocation3 + $0xe0] sm:$0xff]
    %v1477 = vld [vmem:[#allocation3 + $0xe8] sm:$0xff]
    %v1478 = vld [vmem:[#allocation3 + $0xf0] sm:$0xff]
    %v1479 = vld [vmem:[#allocation3 + $0xf8] sm:$0xff]
    %v1480 = vld [vmem:[#allocation11] sm:$0xff]
    %v1481 = vld [vmem:[#allocation11 + $0x8] sm:$0xff]
    %v1482 = vld [vmem:[#allocation11 + $0x10] sm:$0xff]
    %v1483 = vld [vmem:[#allocation11 + $0x18] sm:$0xff]
    %v1484 = vld [vmem:[#allocation11 + $0x20] sm:$0xff]
    %v1485 = vld [vmem:[#allocation11 + $0x28] sm:$0xff]
    %v1486 = vld [vmem:[#allocation11 + $0x30] sm:$0xff]
    %v1487 = vld [vmem:[#allocation11 + $0x38] sm:$0xff]
    %v1488 = vld [vmem:[#allocation11 + $0x40] sm:$0xff]
    %v1489 = vld [vmem:[#allocation11 + $0x48] sm:$0xff]
    %v1490 = vld [vmem:[#allocation11 + $0x50] sm:$0xff]
    %v1491 = vld [vmem:[#allocation11 + $0x58] sm:$0xff]
    %v1492 = vld [vmem:[#allocation11 + $0x60] sm:$0xff]
    %v1493 = vld [vmem:[#allocation11 + $0x68] sm:$0xff]
    %v1494 = vld [vmem:[#allocation11 + $0x70] sm:$0xff]
    %v1495 = vld [vmem:[#allocation11 + $0x78] sm:$0xff]
    %v1496 = vld [vmem:[#allocation11 + $0x80] sm:$0xff]
    %v1497 = vld [vmem:[#allocation11 + $0x88] sm:$0xff]
    %v1498 = vld [vmem:[#allocation11 + $0x90] sm:$0xff]
    %v1499 = vld [vmem:[#allocation11 + $0x98] sm:$0xff]
    %v1500 = vld [vmem:[#allocation11 + $0xa0] sm:$0xff]
    %v1501 = vld [vmem:[#allocation11 + $0xa8] sm:$0xff]
    %v1502 = vld [vmem:[#allocation11 + $0xb0] sm:$0xff]
    %v1503 = vld [vmem:[#allocation11 + $0xb8] sm:$0xff]
    %v1504 = vld [vmem:[#allocation11 + $0xc0] sm:$0xff]
    %v1505 = vld [vmem:[#allocation11 + $0xc8] sm:$0xff]
    %v1506 = vld [vmem:[#allocation11 + $0xd0] sm:$0xff]
    %v1507 = vld [vmem:[#allocation11 + $0xd8] sm:$0xff]
    %v1508 = vld [vmem:[#allocation11 + $0xe0] sm:$0xff]
    %v1509 = vld [vmem:[#allocation11 + $0xe8] sm:$0xff]
    %v1510 = vld [vmem:[#allocation11 + $0xf0] sm:$0xff]
    %v1511 = vld [vmem:[#allocation11 + $0xf8] sm:$0xff]
    %v1512 = vsel %vm148, %v1061, 0
    %v1514 = vsel %vm148, %v1066, 0
    %v1516 = vsel %vm148, %v1071, 0
    %v1518 = vsel %vm148, %v1076, 0
    %v1520 = vsel %vm148, %v1081, 0
    %v1522 = vsel %vm148, %v1086, 0
    %v1524 = vsel %vm148, %v1091, 0
    %v1526 = vsel %vm148, %v1096, 0
    %v1528 = vsel %vm148, %v1101, 0
    %v1530 = vsel %vm148, %v1106, 0
    %v1532 = vsel %vm148, %v1111, 0
    %v1534 = vsel %vm148, %v1116, 0
    %v1536 = vsel %vm148, %v1121, 0
    %v1538 = vsel %vm148, %v1126, 0
    %v1540 = vsel %vm148, %v1131, 0
    %v1542 = vsel %vm148, %v1136, 0
    %v1545 = vsel %vm148, %v1416, 0
    %v1548 = vsel %vm148, %v1417, 0
    %v1551 = vsel %vm148, %v1418, 0
    %v1554 = vsel %vm148, %v1419, 0
    %v1557 = vsel %vm148, %v1420, 0
    %v1560 = vsel %vm148, %v1421, 0
    %v1563 = vsel %vm148, %v1422, 0
    %v1566 = vsel %vm148, %v1423, 0
    %v1569 = vsel %vm148, %v1424, 0
    %v1572 = vsel %vm148, %v1425, 0
    %v1575 = vsel %vm148, %v1426, 0
    %v1578 = vsel %vm148, %v1427, 0
    %v1581 = vsel %vm148, %v1428, 0
    %v1584 = vsel %vm148, %v1429, 0
    %v1587 = vsel %vm148, %v1430, 0
    %v1590 = vsel %vm148, %v1431, 0
    %v1593 = vsel %vm148, %v1432, 0
    %v1596 = vsel %vm148, %v1433, 0
    %v1599 = vsel %vm148, %v1434, 0
    %v1602 = vsel %vm148, %v1435, 0
    %v1605 = vsel %vm148, %v1436, 0
    %v1608 = vsel %vm148, %v1437, 0
    %v1611 = vsel %vm148, %v1438, 0
    %v1614 = vsel %vm148, %v1439, 0
    %v1617 = vsel %vm148, %v1440, 0
    %v1620 = vsel %vm148, %v1441, 0
    %v1623 = vsel %vm148, %v1442, 0
    %v1626 = vsel %vm148, %v1443, 0
    %v1629 = vsel %vm148, %v1444, 0
    %v1632 = vsel %vm148, %v1445, 0
    %v1635 = vsel %vm148, %v1446, 0
    %v1638 = vsel %vm148, %v1447, 0
    %1640 = vmatprep.subr.mxu0 0.0
    %1641 = vmatpush1.xpose.msra.mxu0 %v1590
    %1642 = vmatprep.subr.mxu0 0.0
    %1643 = vmatpush1.xpose.msra.mxu0 %v1587
    %1644 = vmatprep.subr.mxu0 0.0
    %1645 = vmatpush1.xpose.msra.mxu0 %v1584
    %1646 = vmatprep.subr.mxu0 0.0
    %1647 = vmatpush1.xpose.msra.mxu0 %v1581
    %1648 = vmatprep.subr.mxu0 0.0
    %1649 = vmatpush1.xpose.msra.mxu0 %v1578
    %1650 = vmatprep.subr.mxu0 0.0
    %1651 = vmatpush1.xpose.msra.mxu0 %v1575
    %1652 = vmatprep.subr.mxu0 0.0
    %1653 = vmatpush1.xpose.msra.mxu0 %v1572
    %1654 = vmatprep.subr.mxu0 0.0
    %1655 = vmatpush1.xpose.msra.mxu0 %v1569
    %1656 = vmatprep.subr.mxu0 0.0
    %1657 = vmatpush1.xpose.msra.mxu0 %v1566
    %1658 = vmatprep.subr.mxu0 0.0
    %1659 = vmatpush1.xpose.msra.mxu0 %v1563
    %1660 = vmatprep.subr.mxu0 0.0
    %1661 = vmatpush1.xpose.msra.mxu0 %v1560
    %1662 = vmatprep.subr.mxu0 0.0
    %1663 = vmatpush1.xpose.msra.mxu0 %v1557
    %1664 = vmatprep.subr.mxu0 0.0
    %1665 = vmatpush1.xpose.msra.mxu0 %v1554
    %1666 = vmatprep.subr.mxu0 0.0
    %1667 = vmatpush1.xpose.msra.mxu0 %v1551
    %1668 = vmatprep.subr.mxu0 0.0
    %1669 = vmatpush1.xpose.msra.mxu0 %v1548
    %1670 = vmatprep.subr.mxu0 0.0
    %1671 = vmatpush1.xpose.msra.mxu0 %v1545
    %1672 = vmatprep.subr.mxu0 0.0
    %1673 = vmatpush2.xpose.msra.mxu0 %v1638
    %1674 = vmatprep.subr.mxu0 0.0
    %1675 = vmatpush2.xpose.msra.mxu0 %v1635
    %1676 = vmatprep.subr.mxu0 0.0
    %1677 = vmatpush2.xpose.msra.mxu0 %v1632
    %1678 = vmatprep.subr.mxu0 0.0
    %1679 = vmatpush2.xpose.msra.mxu0 %v1629
    %1680 = vmatprep.subr.mxu0 0.0
    %1681 = vmatpush2.xpose.msra.mxu0 %v1626
    %1682 = vmatprep.subr.mxu0 0.0
    %1683 = vmatpush2.xpose.msra.mxu0 %v1623
    %1684 = vmatprep.subr.mxu0 0.0
    %1685 = vmatpush2.xpose.msra.mxu0 %v1620
    %1686 = vmatprep.subr.mxu0 0.0
    %1687 = vmatpush2.xpose.msra.mxu0 %v1617
    %1688 = vmatprep.subr.mxu0 0.0
    %1689 = vmatpush2.xpose.msra.mxu0 %v1614
    %1690 = vmatprep.subr.mxu0 0.0
    %1691 = vmatpush2.xpose.msra.mxu0 %v1611
    %1692 = vmatprep.subr.mxu0 0.0
    %1693 = vmatpush2.xpose.msra.mxu0 %v1608
    %1694 = vmatprep.subr.mxu0 0.0
    %1695 = vmatpush2.xpose.msra.mxu0 %v1605
    %1696 = vmatprep.subr.mxu0 0.0
    %1697 = vmatpush2.xpose.msra.mxu0 %v1602
    %1698 = vmatprep.subr.mxu0 0.0
    %1699 = vmatpush2.xpose.msra.mxu0 %v1599
    %1700 = vmatprep.subr.mxu0 0.0
    %1701 = vmatpush2.xpose.msra.mxu0 %v1596
    %1702 = vmatprep.subr.mxu0 0.0
    %1703 = vmatpush2.xpose.msra.mxu0 %v1593
    %1704 = vmatprep.mubr.f32.mxu0 0.0
    %1705 = vmatmul.mubr.f32.gmra.mxu0 %v1512
    %v1706 = vpop.f32.mrf.mxu0
    %v1707 = vadd.f32 %v1480, %v1706
    %v1708 = vpop.f32.mrf.mxu0
    %v1709 = vadd.f32 %v1481, %v1708
    %1710 = vmatprep.mubr.f32.mxu0 0.0
    %1711 = vmatmul.mubr.f32.gmra.mxu0 %v1514
    %v1712 = vpop.f32.mrf.mxu0
    %v1713 = vadd.f32 %v1482, %v1712
    %v1714 = vpop.f32.mrf.mxu0
    %v1715 = vadd.f32 %v1483, %v1714
    %1716 = vmatprep.mubr.f32.mxu0 0.0
    %1717 = vmatmul.mubr.f32.gmra.mxu0 %v1516
    %v1718 = vpop.f32.mrf.mxu0
    %v1719 = vadd.f32 %v1484, %v1718
    %v1720 = vpop.f32.mrf.mxu0
    %v1721 = vadd.f32 %v1485, %v1720
    %1722 = vmatprep.mubr.f32.mxu0 0.0
    %1723 = vmatmul.mubr.f32.gmra.mxu0 %v1518
    %v1724 = vpop.f32.mrf.mxu0
    %v1725 = vadd.f32 %v1486, %v1724
    %v1726 = vpop.f32.mrf.mxu0
    %v1727 = vadd.f32 %v1487, %v1726
    %1728 = vmatprep.mubr.f32.mxu0 0.0
    %1729 = vmatmul.mubr.f32.gmra.mxu0 %v1520
    %v1730 = vpop.f32.mrf.mxu0
    %v1731 = vadd.f32 %v1488, %v1730
    %v1732 = vpop.f32.mrf.mxu0
    %v1733 = vadd.f32 %v1489, %v1732
    %1734 = vmatprep.mubr.f32.mxu0 0.0
    %1735 = vmatmul.mubr.f32.gmra.mxu0 %v1522
    %v1736 = vpop.f32.mrf.mxu0
    %v1737 = vadd.f32 %v1490, %v1736
    %v1738 = vpop.f32.mrf.mxu0
    %v1739 = vadd.f32 %v1491, %v1738
    %1740 = vmatprep.mubr.f32.mxu0 0.0
    %1741 = vmatmul.mubr.f32.gmra.mxu0 %v1524
    %v1742 = vpop.f32.mrf.mxu0
    %v1743 = vadd.f32 %v1492, %v1742
    %v1744 = vpop.f32.mrf.mxu0
    %v1745 = vadd.f32 %v1493, %v1744
    %1746 = vmatprep.mubr.f32.mxu0 0.0
    %1747 = vmatmul.mubr.f32.gmra.mxu0 %v1526
    %v1748 = vpop.f32.mrf.mxu0
    %v1749 = vadd.f32 %v1494, %v1748
    %v1750 = vpop.f32.mrf.mxu0
    %v1751 = vadd.f32 %v1495, %v1750
    %1752 = vmatprep.mubr.f32.mxu0 0.0
    %1753 = vmatmul.mubr.f32.gmra.mxu0 %v1528
    %v1754 = vpop.f32.mrf.mxu0
    %v1755 = vadd.f32 %v1496, %v1754
    %v1756 = vpop.f32.mrf.mxu0
    %v1757 = vadd.f32 %v1497, %v1756
    %1758 = vmatprep.mubr.f32.mxu0 0.0
    %1759 = vmatmul.mubr.f32.gmra.mxu0 %v1530
    %v1760 = vpop.f32.mrf.mxu0
    %v1761 = vadd.f32 %v1498, %v1760
    %v1762 = vpop.f32.mrf.mxu0
    %v1763 = vadd.f32 %v1499, %v1762
    %1764 = vmatprep.mubr.f32.mxu0 0.0
    %1765 = vmatmul.mubr.f32.gmra.mxu0 %v1532
    %v1766 = vpop.f32.mrf.mxu0
    %v1767 = vadd.f32 %v1500, %v1766
    %v1768 = vpop.f32.mrf.mxu0
    %v1769 = vadd.f32 %v1501, %v1768
    %1770 = vmatprep.mubr.f32.mxu0 0.0
    %1771 = vmatmul.mubr.f32.gmra.mxu0 %v1534
    %v1772 = vpop.f32.mrf.mxu0
    %v1773 = vadd.f32 %v1502, %v1772
    %v1774 = vpop.f32.mrf.mxu0
    %v1775 = vadd.f32 %v1503, %v1774
    %1776 = vmatprep.mubr.f32.mxu0 0.0
    %1777 = vmatmul.mubr.f32.gmra.mxu0 %v1536
    %v1778 = vpop.f32.mrf.mxu0
    %v1779 = vadd.f32 %v1504, %v1778
    %v1780 = vpop.f32.mrf.mxu0
    %v1781 = vadd.f32 %v1505, %v1780
    %1782 = vmatprep.mubr.f32.mxu0 0.0
    %1783 = vmatmul.mubr.f32.gmra.mxu0 %v1538
    %v1784 = vpop.f32.mrf.mxu0
    %v1785 = vadd.f32 %v1506, %v1784
    %v1786 = vpop.f32.mrf.mxu0
    %v1787 = vadd.f32 %v1507, %v1786
    %1788 = vmatprep.mubr.f32.mxu0 0.0
    %1789 = vmatmul.mubr.f32.gmra.mxu0 %v1540
    %v1790 = vpop.f32.mrf.mxu0
    %v1791 = vadd.f32 %v1508, %v1790
    %v1792 = vpop.f32.mrf.mxu0
    %v1793 = vadd.f32 %v1509, %v1792
    %1794 = vmatprep.mubr.f32.mxu0 0.0
    %1795 = vmatmul.mubr.f32.gmra.mxu0 %v1542
    %v1796 = vpop.f32.mrf.mxu0
    %v1797 = vadd.f32 %v1510, %v1796
    %v1798 = vpop.f32.mrf.mxu0
    %v1799 = vadd.f32 %v1511, %v1798
    %1800 = vdwg.mxu0
    %v1801 = vmax.f32 %v1707, %v1709
    %1802 = vmax.xlane.f32.xlu0 %v1801
    %v1803 = vpop.xlane.xlu0 %1802
    %v1804 = vmax.f32 %v1713, %v1715
    %1805 = vmax.xlane.f32.xlu0 %v1804
    %v1806 = vpop.xlane.xlu0 %1805
    %v1807 = vmax.f32 %v1719, %v1721
    %1808 = vmax.xlane.f32.xlu0 %v1807
    %v1809 = vpop.xlane.xlu0 %1808
    %v1810 = vmax.f32 %v1725, %v1727
    %1811 = vmax.xlane.f32.xlu0 %v1810
    %v1812 = vpop.xlane.xlu0 %1811
    %v1813 = vmax.f32 %v1731, %v1733
    %1814 = vmax.xlane.f32.xlu0 %v1813
    %v1815 = vpop.xlane.xlu0 %1814
    %v1816 = vmax.f32 %v1737, %v1739
    %1817 = vmax.xlane.f32.xlu0 %v1816
    %v1818 = vpop.xlane.xlu0 %1817
    %v1819 = vmax.f32 %v1743, %v1745
    %1820 = vmax.xlane.f32.xlu0 %v1819
    %v1821 = vpop.xlane.xlu0 %1820
    %v1822 = vmax.f32 %v1749, %v1751
    %1823 = vmax.xlane.f32.xlu0 %v1822
    %v1824 = vpop.xlane.xlu0 %1823
    %v1825 = vmax.f32 %v1755, %v1757
    %1826 = vmax.xlane.f32.xlu0 %v1825
    %v1827 = vpop.xlane.xlu0 %1826
    %v1828 = vmax.f32 %v1761, %v1763
    %1829 = vmax.xlane.f32.xlu0 %v1828
    %v1830 = vpop.xlane.xlu0 %1829
    %v1831 = vmax.f32 %v1767, %v1769
    %1832 = vmax.xlane.f32.xlu0 %v1831
    %v1833 = vpop.xlane.xlu0 %1832
    %v1834 = vmax.f32 %v1773, %v1775
    %1835 = vmax.xlane.f32.xlu0 %v1834
    %v1836 = vpop.xlane.xlu0 %1835
    %v1837 = vmax.f32 %v1779, %v1781
    %1838 = vmax.xlane.f32.xlu0 %v1837
    %v1839 = vpop.xlane.xlu0 %1838
    %v1840 = vmax.f32 %v1785, %v1787
    %1841 = vmax.xlane.f32.xlu0 %v1840
    %v1842 = vpop.xlane.xlu0 %1841
    %v1843 = vmax.f32 %v1791, %v1793
    %1844 = vmax.xlane.f32.xlu0 %v1843
    %v1845 = vpop.xlane.xlu0 %1844
    %v1846 = vmax.f32 %v1797, %v1799
    %1847 = vmax.xlane.f32.xlu0 %v1846
    %v1848 = vpop.xlane.xlu0 %1847
    %v1849 = vsub.f32 %v1707, %v1803
    %v1850 = vsub.f32 %v1709, %v1803
    %v1851 = vsub.f32 %v1713, %v1806
    %v1852 = vsub.f32 %v1715, %v1806
    %v1853 = vsub.f32 %v1719, %v1809
    %v1854 = vsub.f32 %v1721, %v1809
    %v1855 = vsub.f32 %v1725, %v1812
    %v1856 = vsub.f32 %v1727, %v1812
    %v1857 = vsub.f32 %v1731, %v1815
    %v1858 = vsub.f32 %v1733, %v1815
    %v1859 = vsub.f32 %v1737, %v1818
    %v1860 = vsub.f32 %v1739, %v1818
    %v1861 = vsub.f32 %v1743, %v1821
    %v1862 = vsub.f32 %v1745, %v1821
    %v1863 = vsub.f32 %v1749, %v1824
    %v1864 = vsub.f32 %v1751, %v1824
    %v1865 = vsub.f32 %v1755, %v1827
    %v1866 = vsub.f32 %v1757, %v1827
    %v1867 = vsub.f32 %v1761, %v1830
    %v1868 = vsub.f32 %v1763, %v1830
    %v1869 = vsub.f32 %v1767, %v1833
    %v1870 = vsub.f32 %v1769, %v1833
    %v1871 = vsub.f32 %v1773, %v1836
    %v1872 = vsub.f32 %v1775, %v1836
    %v1873 = vsub.f32 %v1779, %v1839
    %v1874 = vsub.f32 %v1781, %v1839
    %v1875 = vsub.f32 %v1785, %v1842
    %v1876 = vsub.f32 %v1787, %v1842
    %v1877 = vsub.f32 %v1791, %v1845
    %v1878 = vsub.f32 %v1793, %v1845
    %v1879 = vsub.f32 %v1797, %v1848
    %v1880 = vsub.f32 %v1799, %v1848
    %v1881 = vmul.f32 %v1849, 1.442695
    %v1882 = vpow.pop %v1881
    %v1883 = vmul.f32 %v1850, 1.442695
    %v1884 = vpow.pop %v1883
    %v1885 = vmul.f32 %v1851, 1.442695
    %v1886 = vpow.pop %v1885
    %v1887 = vmul.f32 %v1852, 1.442695
    %v1888 = vpow.pop %v1887
    %v1889 = vmul.f32 %v1853, 1.442695
    %v1890 = vpow.pop %v1889
    %v1891 = vmul.f32 %v1854, 1.442695
    %v1892 = vpow.pop %v1891
    %v1893 = vmul.f32 %v1855, 1.442695
    %v1894 = vpow.pop %v1893
    %v1895 = vmul.f32 %v1856, 1.442695
    %v1896 = vpow.pop %v1895
    %v1897 = vmul.f32 %v1857, 1.442695
    %v1898 = vpow.pop %v1897
    %v1899 = vmul.f32 %v1858, 1.442695
    %v1900 = vpow.pop %v1899
    %v1901 = vmul.f32 %v1859, 1.442695
    %v1902 = vpow.pop %v1901
    %v1903 = vmul.f32 %v1860, 1.442695
    %v1904 = vpow.pop %v1903
    %v1905 = vmul.f32 %v1861, 1.442695
    %v1906 = vpow.pop %v1905
    %v1907 = vmul.f32 %v1862, 1.442695
    %v1908 = vpow.pop %v1907
    %v1909 = vmul.f32 %v1863, 1.442695
    %v1910 = vpow.pop %v1909
    %v1911 = vmul.f32 %v1864, 1.442695
    %v1912 = vpow.pop %v1911
    %v1913 = vmul.f32 %v1865, 1.442695
    %v1914 = vpow.pop %v1913
    %v1915 = vmul.f32 %v1866, 1.442695
    %v1916 = vpow.pop %v1915
    %v1917 = vmul.f32 %v1867, 1.442695
    %v1918 = vpow.pop %v1917
    %v1919 = vmul.f32 %v1868, 1.442695
    %v1920 = vpow.pop %v1919
    %v1921 = vmul.f32 %v1869, 1.442695
    %v1922 = vpow.pop %v1921
    %v1923 = vmul.f32 %v1870, 1.442695
    %v1924 = vpow.pop %v1923
    %v1925 = vmul.f32 %v1871, 1.442695
    %v1926 = vpow.pop %v1925
    %v1927 = vmul.f32 %v1872, 1.442695
    %v1928 = vpow.pop %v1927
    %v1929 = vmul.f32 %v1873, 1.442695
    %v1930 = vpow.pop %v1929
    %v1931 = vmul.f32 %v1874, 1.442695
    %v1932 = vpow.pop %v1931
    %v1933 = vmul.f32 %v1875, 1.442695
    %v1934 = vpow.pop %v1933
    %v1935 = vmul.f32 %v1876, 1.442695
    %v1936 = vpow.pop %v1935
    %v1937 = vmul.f32 %v1877, 1.442695
    %v1938 = vpow.pop %v1937
    %v1939 = vmul.f32 %v1878, 1.442695
    %v1940 = vpow.pop %v1939
    %v1941 = vmul.f32 %v1879, 1.442695
    %v1942 = vpow.pop %v1941
    %v1943 = vmul.f32 %v1880, 1.442695
    %v1944 = vpow.pop %v1943
    %v1945 = vadd.f32 %v1882, %v1884
    %1946 = vadd.xlane.f32.xlu0 %v1945
    %v1947 = vpop.xlane.xlu0 %1946
    %v1948 = vadd.f32 %v1886, %v1888
    %1949 = vadd.xlane.f32.xlu0 %v1948
    %v1950 = vpop.xlane.xlu0 %1949
    %v1951 = vadd.f32 %v1890, %v1892
    %1952 = vadd.xlane.f32.xlu0 %v1951
    %v1953 = vpop.xlane.xlu0 %1952
    %v1954 = vadd.f32 %v1894, %v1896
    %1955 = vadd.xlane.f32.xlu0 %v1954
    %v1956 = vpop.xlane.xlu0 %1955
    %v1957 = vadd.f32 %v1898, %v1900
    %1958 = vadd.xlane.f32.xlu0 %v1957
    %v1959 = vpop.xlane.xlu0 %1958
    %v1960 = vadd.f32 %v1902, %v1904
    %1961 = vadd.xlane.f32.xlu0 %v1960
    %v1962 = vpop.xlane.xlu0 %1961
    %v1963 = vadd.f32 %v1906, %v1908
    %1964 = vadd.xlane.f32.xlu0 %v1963
    %v1965 = vpop.xlane.xlu0 %1964
    %v1966 = vadd.f32 %v1910, %v1912
    %1967 = vadd.xlane.f32.xlu0 %v1966
    %v1968 = vpop.xlane.xlu0 %1967
    %v1969 = vadd.f32 %v1914, %v1916
    %1970 = vadd.xlane.f32.xlu0 %v1969
    %v1971 = vpop.xlane.xlu0 %1970
    %v1972 = vadd.f32 %v1918, %v1920
    %1973 = vadd.xlane.f32.xlu0 %v1972
    %v1974 = vpop.xlane.xlu0 %1973
    %v1975 = vadd.f32 %v1922, %v1924
    %1976 = vadd.xlane.f32.xlu0 %v1975
    %v1977 = vpop.xlane.xlu0 %1976
    %v1978 = vadd.f32 %v1926, %v1928
    %1979 = vadd.xlane.f32.xlu0 %v1978
    %v1980 = vpop.xlane.xlu0 %1979
    %v1981 = vadd.f32 %v1930, %v1932
    %1982 = vadd.xlane.f32.xlu0 %v1981
    %v1983 = vpop.xlane.xlu0 %1982
    %v1984 = vadd.f32 %v1934, %v1936
    %1985 = vadd.xlane.f32.xlu0 %v1984
    %v1986 = vpop.xlane.xlu0 %1985
    %v1987 = vadd.f32 %v1938, %v1940
    %1988 = vadd.xlane.f32.xlu0 %v1987
    %v1989 = vpop.xlane.xlu0 %1988
    %v1990 = vadd.f32 %v1942, %v1944
    %1991 = vadd.xlane.f32.xlu0 %v1990
    %v1992 = vpop.xlane.xlu0 %1991
    %v1993 = vrcp.pop %v1947
    %v1994 = vrcp.pop %v1950
    %v1995 = vrcp.pop %v1953
    %v1996 = vrcp.pop %v1956
    %v1997 = vrcp.pop %v1959
    %v1998 = vrcp.pop %v1962
    %v1999 = vrcp.pop %v1965
    %v2000 = vrcp.pop %v1968
    %v2001 = vrcp.pop %v1971
    %v2002 = vrcp.pop %v1974
    %v2003 = vrcp.pop %v1977
    %v2004 = vrcp.pop %v1980
    %v2005 = vrcp.pop %v1983
    %v2006 = vrcp.pop %v1986
    %v2007 = vrcp.pop %v1989
    %v2008 = vrcp.pop %v1992
    %v2009 = vmul.f32 %v1882, %v1993
    %v2010 = vmul.f32 %v1884, %v1993
    %v2011 = vmul.f32 %v1886, %v1994
    %v2012 = vmul.f32 %v1888, %v1994
    %v2013 = vmul.f32 %v1890, %v1995
    %v2014 = vmul.f32 %v1892, %v1995
    %v2015 = vmul.f32 %v1894, %v1996
    %v2016 = vmul.f32 %v1896, %v1996
    %v2017 = vmul.f32 %v1898, %v1997
    %v2018 = vmul.f32 %v1900, %v1997
    %v2019 = vmul.f32 %v1902, %v1998
    %v2020 = vmul.f32 %v1904, %v1998
    %v2021 = vmul.f32 %v1906, %v1999
    %v2022 = vmul.f32 %v1908, %v1999
    %v2023 = vmul.f32 %v1910, %v2000
    %v2024 = vmul.f32 %v1912, %v2000
    %v2025 = vmul.f32 %v1914, %v2001
    %v2026 = vmul.f32 %v1916, %v2001
    %v2027 = vmul.f32 %v1918, %v2002
    %v2028 = vmul.f32 %v1920, %v2002
    %v2029 = vmul.f32 %v1922, %v2003
    %v2030 = vmul.f32 %v1924, %v2003
    %v2031 = vmul.f32 %v1926, %v2004
    %v2032 = vmul.f32 %v1928, %v2004
    %v2033 = vmul.f32 %v1930, %v2005
    %v2034 = vmul.f32 %v1932, %v2005
    %v2035 = vmul.f32 %v1934, %v2006
    %v2036 = vmul.f32 %v1936, %v2006
    %v2037 = vmul.f32 %v1938, %v2007
    %v2038 = vmul.f32 %v1940, %v2007
    %v2039 = vmul.f32 %v1942, %v2008
    %v2040 = vmul.f32 %v1944, %v2008
    %2041 = vmatprep.subr.mxu0 0.0
    %2042 = vmatpush1.msra.mxu0 %v1463
    %2043 = vmatprep.subr.mxu0 0.0
    %2044 = vmatpush1.msra.mxu0 %v1462
    %2045 = vmatprep.subr.mxu0 0.0
    %2046 = vmatpush1.msra.mxu0 %v1461
    %2047 = vmatprep.subr.mxu0 0.0
    %2048 = vmatpush1.msra.mxu0 %v1460
    %2049 = vmatprep.subr.mxu0 0.0
    %2050 = vmatpush1.msra.mxu0 %v1459
    %2051 = vmatprep.subr.mxu0 0.0
    %2052 = vmatpush1.msra.mxu0 %v1458
    %2053 = vmatprep.subr.mxu0 0.0
    %2054 = vmatpush1.msra.mxu0 %v1457
    %2055 = vmatprep.subr.mxu0 0.0
    %2056 = vmatpush1.msra.mxu0 %v1456
    %2057 = vmatprep.subr.mxu0 0.0
    %2058 = vmatpush1.msra.mxu0 %v1455
    %2059 = vmatprep.subr.mxu0 0.0
    %2060 = vmatpush1.msra.mxu0 %v1454
    %2061 = vmatprep.subr.mxu0 0.0
    %2062 = vmatpush1.msra.mxu0 %v1453
    %2063 = vmatprep.subr.mxu0 0.0
    %2064 = vmatpush1.msra.mxu0 %v1452
    %2065 = vmatprep.subr.mxu0 0.0
    %2066 = vmatpush1.msra.mxu0 %v1451
    %2067 = vmatprep.subr.mxu0 0.0
    %2068 = vmatpush1.msra.mxu0 %v1450
    %2069 = vmatprep.subr.mxu0 0.0
    %2070 = vmatpush1.msra.mxu0 %v1449
    %2071 = vmatprep.subr.mxu0 0.0
    %2072 = vmatpush1.msra.mxu0 %v1448
    %2073 = vmatprep.subr.mxu0 0.0
    %2074 = vmatpush2.msra.mxu0 %v1479
    %2075 = vmatprep.subr.mxu0 0.0
    %2076 = vmatpush2.msra.mxu0 %v1478
    %2077 = vmatprep.subr.mxu0 0.0
    %2078 = vmatpush2.msra.mxu0 %v1477
    %2079 = vmatprep.subr.mxu0 0.0
    %2080 = vmatpush2.msra.mxu0 %v1476
    %2081 = vmatprep.subr.mxu0 0.0
    %2082 = vmatpush2.msra.mxu0 %v1475
    %2083 = vmatprep.subr.mxu0 0.0
    %2084 = vmatpush2.msra.mxu0 %v1474
    %2085 = vmatprep.subr.mxu0 0.0
    %2086 = vmatpush2.msra.mxu0 %v1473
    %2087 = vmatprep.subr.mxu0 0.0
    %2088 = vmatpush2.msra.mxu0 %v1472
    %2089 = vmatprep.subr.mxu0 0.0
    %2090 = vmatpush2.msra.mxu0 %v1471
    %2091 = vmatprep.subr.mxu0 0.0
    %2092 = vmatpush2.msra.mxu0 %v1470
    %2093 = vmatprep.subr.mxu0 0.0
    %2094 = vmatpush2.msra.mxu0 %v1469
    %2095 = vmatprep.subr.mxu0 0.0
    %2096 = vmatpush2.msra.mxu0 %v1468
    %2097 = vmatprep.subr.mxu0 0.0
    %2098 = vmatpush2.msra.mxu0 %v1467
    %2099 = vmatprep.subr.mxu0 0.0
    %2100 = vmatpush2.msra.mxu0 %v1466
    %2101 = vmatprep.subr.mxu0 0.0
    %2102 = vmatpush2.msra.mxu0 %v1465
    %2103 = vmatprep.subr.mxu0 0.0
    %2104 = vmatpush2.msra.mxu0 %v1464
    %2105 = vmatprep.mubr.f32.mxu0 %v2010
    %2106 = vmatmul.mubr.f32.gmra.mxu0 %v2009
    %v2107 = vpop.f32.mrf.mxu0
    %v2108 = vadd.f32 0.0, %v2107
    %v2109 = vpop.f32.mrf.mxu0
    %2110 = vmatprep.mubr.f32.mxu0 %v2012
    %2111 = vmatmul.mubr.f32.gmra.mxu0 %v2011
    %v2112 = vpop.f32.mrf.mxu0
    %v2113 = vadd.f32 0.0, %v2112
    %v2114 = vpop.f32.mrf.mxu0
    %2115 = vmatprep.mubr.f32.mxu0 %v2014
    %2116 = vmatmul.mubr.f32.gmra.mxu0 %v2013
    %v2117 = vpop.f32.mrf.mxu0
    %v2118 = vadd.f32 0.0, %v2117
    %v2119 = vpop.f32.mrf.mxu0
    %2120 = vmatprep.mubr.f32.mxu0 %v2016
    %2121 = vmatmul.mubr.f32.gmra.mxu0 %v2015
    %v2122 = vpop.f32.mrf.mxu0
    %v2123 = vadd.f32 0.0, %v2122
    %v2124 = vpop.f32.mrf.mxu0
    %2125 = vmatprep.mubr.f32.mxu0 %v2018
    %2126 = vmatmul.mubr.f32.gmra.mxu0 %v2017
    %v2127 = vpop.f32.mrf.mxu0
    %v2128 = vadd.f32 0.0, %v2127
    %v2129 = vpop.f32.mrf.mxu0
    %2130 = vmatprep.mubr.f32.mxu0 %v2020
    %2131 = vmatmul.mubr.f32.gmra.mxu0 %v2019
    %v2132 = vpop.f32.mrf.mxu0
    %v2133 = vadd.f32 0.0, %v2132
    %v2134 = vpop.f32.mrf.mxu0
    %2135 = vmatprep.mubr.f32.mxu0 %v2022
    %2136 = vmatmul.mubr.f32.gmra.mxu0 %v2021
    %v2137 = vpop.f32.mrf.mxu0
    %v2138 = vadd.f32 0.0, %v2137
    %v2139 = vpop.f32.mrf.mxu0
    %2140 = vmatprep.mubr.f32.mxu0 %v2024
    %2141 = vmatmul.mubr.f32.gmra.mxu0 %v2023
    %v2142 = vpop.f32.mrf.mxu0
    %v2143 = vadd.f32 0.0, %v2142
    %v2144 = vpop.f32.mrf.mxu0
    %2145 = vmatprep.mubr.f32.mxu0 %v2026
    %2146 = vmatmul.mubr.f32.gmra.mxu0 %v2025
    %v2147 = vpop.f32.mrf.mxu0
    %v2148 = vadd.f32 0.0, %v2147
    %v2149 = vpop.f32.mrf.mxu0
    %2150 = vmatprep.mubr.f32.mxu0 %v2028
    %2151 = vmatmul.mubr.f32.gmra.mxu0 %v2027
    %v2152 = vpop.f32.mrf.mxu0
    %v2153 = vadd.f32 0.0, %v2152
    %v2154 = vpop.f32.mrf.mxu0
    %2155 = vmatprep.mubr.f32.mxu0 %v2030
    %2156 = vmatmul.mubr.f32.gmra.mxu0 %v2029
    %v2157 = vpop.f32.mrf.mxu0
    %v2158 = vadd.f32 0.0, %v2157
    %v2159 = vpop.f32.mrf.mxu0
    %2160 = vmatprep.mubr.f32.mxu0 %v2032
    %2161 = vmatmul.mubr.f32.gmra.mxu0 %v2031
    %v2162 = vpop.f32.mrf.mxu0
    %v2163 = vadd.f32 0.0, %v2162
    %v2164 = vpop.f32.mrf.mxu0
    %2165 = vmatprep.mubr.f32.mxu0 %v2034
    %2166 = vmatmul.mubr.f32.gmra.mxu0 %v2033
    %v2167 = vpop.f32.mrf.mxu0
    %v2168 = vadd.f32 0.0, %v2167
    %v2169 = vpop.f32.mrf.mxu0
    %2170 = vmatprep.mubr.f32.mxu0 %v2036
    %2171 = vmatmul.mubr.f32.gmra.mxu0 %v2035
    %v2172 = vpop.f32.mrf.mxu0
    %v2173 = vadd.f32 0.0, %v2172
    %v2174 = vpop.f32.mrf.mxu0
    %2175 = vmatprep.mubr.f32.mxu0 %v2038
    %2176 = vmatmul.mubr.f32.gmra.mxu0 %v2037
    %v2177 = vpop.f32.mrf.mxu0
    %v2178 = vadd.f32 0.0, %v2177
    %v2179 = vpop.f32.mrf.mxu0
    %2180 = vmatprep.mubr.f32.mxu0 %v2040
    %2181 = vmatmul.mubr.f32.gmra.mxu0 %v2039
    %v2182 = vpop.f32.mrf.mxu0
    %v2183 = vadd.f32 0.0, %v2182
    %v2184 = vpop.f32.mrf.mxu0
    %2185 = vdwg.mxu0
    %v2186 = vld [vmem:[#allocation9] sm:$0xff]
    %v2187 = vld [vmem:[#allocation9 + $0x8] sm:$0xff]
    %v2188 = vld [vmem:[#allocation9 + $0x10] sm:$0xff]
    %v2189 = vld [vmem:[#allocation9 + $0x18] sm:$0xff]
    %v2190 = vld [vmem:[%s11] sm:$0x1]
    %v2192 = vlaneseq
    %v2193 = vshrl.u32 %v2192, 7
    %v2194 = vsub.s32 0, %v2193
    %v2195 = vrot.slane %v2190, %v2194
    %v2198 = vsel %vm148, %v2108, 0
    %v2201 = vsel %vm148, %v2113, 0
    %v2204 = vsel %vm148, %v2118, 0
    %v2207 = vsel %vm148, %v2123, 0
    %v2210 = vsel %vm148, %v2128, 0
    %v2213 = vsel %vm148, %v2133, 0
    %v2216 = vsel %vm148, %v2138, 0
    %v2219 = vsel %vm148, %v2143, 0
    %v2222 = vsel %vm148, %v2148, 0
    %v2225 = vsel %vm148, %v2153, 0
    %v2228 = vsel %vm148, %v2158, 0
    %v2231 = vsel %vm148, %v2163, 0
    %v2234 = vsel %vm148, %v2168, 0
    %v2237 = vsel %vm148, %v2173, 0
    %v2240 = vsel %vm148, %v2178, 0
    %v2243 = vsel %vm148, %v2183, 0
    %2245 = vmatprep.subr.mxu0 0.0
    %2246 = vmatpush1.msra.mxu0 0.0
    %2247 = vmatprep.subr.mxu0 0.0
    %2248 = vmatpush1.msra.mxu0 0.0
    %2249 = vmatprep.subr.mxu0 0.0
    %2250 = vmatpush1.msra.mxu0 0.0
    %2251 = vmatprep.subr.mxu0 0.0
    %2252 = vmatpush1.msra.mxu0 0.0
    %2253 = vmatprep.subr.mxu0 0.0
    %2254 = vmatpush1.msra.mxu0 0.0
    %2255 = vmatprep.subr.mxu0 0.0
    %2256 = vmatpush1.msra.mxu0 0.0
    %2257 = vmatprep.subr.mxu0 0.0
    %2258 = vmatpush1.msra.mxu0 0.0
    %2259 = vmatprep.subr.mxu0 0.0
    %2260 = vmatpush1.msra.mxu0 0.0
    %2261 = vmatprep.subr.mxu0 0.0
    %2262 = vmatpush1.msra.mxu0 0.0
    %2263 = vmatprep.subr.mxu0 0.0
    %2264 = vmatpush1.msra.mxu0 0.0
    %2265 = vmatprep.subr.mxu0 0.0
    %2266 = vmatpush1.msra.mxu0 0.0
    %2267 = vmatprep.subr.mxu0 0.0
    %2268 = vmatpush1.msra.mxu0 0.0
    %2269 = vmatprep.subr.mxu0 0.0
    %2270 = vmatpush1.msra.mxu0 %v2189
    %2271 = vmatprep.subr.mxu0 0.0
    %2272 = vmatpush1.msra.mxu0 %v2188
    %2273 = vmatprep.subr.mxu0 0.0
    %2274 = vmatpush1.msra.mxu0 %v2187
    %2275 = vmatprep.subr.mxu0 0.0
    %2276 = vmatpush1.msra.mxu0 %v2186
    %2277 = vmatprep.subr.mxu0 0.0
    %2278 = vmatpush2.msra.mxu0 0.0
    %2279 = vmatprep.subr.mxu0 0.0
    %2280 = vmatpush2.msra.mxu0 0.0
    %2281 = vmatprep.subr.mxu0 0.0
    %2282 = vmatpush2.msra.mxu0 0.0
    %2283 = vmatprep.subr.mxu0 0.0
    %2284 = vmatpush2.msra.mxu0 0.0
    %2285 = vmatprep.subr.mxu0 0.0
    %2286 = vmatpush2.msra.mxu0 0.0
    %2287 = vmatprep.subr.mxu0 0.0
    %2288 = vmatpush2.msra.mxu0 0.0
    %2289 = vmatprep.subr.mxu0 0.0
    %2290 = vmatpush2.msra.mxu0 0.0
    %2291 = vmatprep.subr.mxu0 0.0
    %2292 = vmatpush2.msra.mxu0 0.0
    %2293 = vmatprep.subr.mxu0 0.0
    %2294 = vmatpush2.msra.mxu0 0.0
    %2295 = vmatprep.subr.mxu0 0.0
    %2296 = vmatpush2.msra.mxu0 0.0
    %2297 = vmatprep.subr.mxu0 0.0
    %2298 = vmatpush2.msra.mxu0 0.0
    %2299 = vmatprep.subr.mxu0 0.0
    %2300 = vmatpush2.msra.mxu0 0.0
    %2301 = vmatprep.subr.mxu0 0.0
    %2302 = vmatpush2.msra.mxu0 0.0
    %2303 = vmatprep.subr.mxu0 0.0
    %2304 = vmatpush2.msra.mxu0 0.0
    %2305 = vmatprep.subr.mxu0 0.0
    %2306 = vmatpush2.msra.mxu0 0.0
    %2307 = vmatprep.subr.mxu0 0.0
    %2308 = vmatpush2.msra.mxu0 0.0
    %2309 = vmatprep.mubr.f32.mxu0 0.0
    %2310 = vmatmul.mubr.f32.gmra.mxu0 %v2198
    %v2311 = vpop.f32.mrf.mxu0
    %v2312 = vadd.f32 %v2195, %v2311
    %v2313 = vpop.f32.mrf.mxu0
    %2314 = vmatprep.mubr.f32.mxu0 0.0
    %2315 = vmatmul.mubr.f32.gmra.mxu0 %v2201
    %v2316 = vpop.f32.mrf.mxu0
    %v2317 = vadd.f32 %v2195, %v2316
    %v2318 = vpop.f32.mrf.mxu0
    %2319 = vmatprep.mubr.f32.mxu0 0.0
    %2320 = vmatmul.mubr.f32.gmra.mxu0 %v2204
    %v2321 = vpop.f32.mrf.mxu0
    %v2322 = vadd.f32 %v2195, %v2321
    %v2323 = vpop.f32.mrf.mxu0
    %2324 = vmatprep.mubr.f32.mxu0 0.0
    %2325 = vmatmul.mubr.f32.gmra.mxu0 %v2207
    %v2326 = vpop.f32.mrf.mxu0
    %v2327 = vadd.f32 %v2195, %v2326
    %v2328 = vpop.f32.mrf.mxu0
    %2329 = vmatprep.mubr.f32.mxu0 0.0
    %2330 = vmatmul.mubr.f32.gmra.mxu0 %v2210
    %v2331 = vpop.f32.mrf.mxu0
    %v2332 = vadd.f32 %v2195, %v2331
    %v2333 = vpop.f32.mrf.mxu0
    %2334 = vmatprep.mubr.f32.mxu0 0.0
    %2335 = vmatmul.mubr.f32.gmra.mxu0 %v2213
    %v2336 = vpop.f32.mrf.mxu0
    %v2337 = vadd.f32 %v2195, %v2336
    %v2338 = vpop.f32.mrf.mxu0
    %2339 = vmatprep.mubr.f32.mxu0 0.0
    %2340 = vmatmul.mubr.f32.gmra.mxu0 %v2216
    %v2341 = vpop.f32.mrf.mxu0
    %v2342 = vadd.f32 %v2195, %v2341
    %v2343 = vpop.f32.mrf.mxu0
    %2344 = vmatprep.mubr.f32.mxu0 0.0
    %2345 = vmatmul.mubr.f32.gmra.mxu0 %v2219
    %v2346 = vpop.f32.mrf.mxu0
    %v2347 = vadd.f32 %v2195, %v2346
    %v2348 = vpop.f32.mrf.mxu0
    %2349 = vmatprep.mubr.f32.mxu0 0.0
    %2350 = vmatmul.mubr.f32.gmra.mxu0 %v2222
    %v2351 = vpop.f32.mrf.mxu0
    %v2352 = vadd.f32 %v2195, %v2351
    %v2353 = vpop.f32.mrf.mxu0
    %2354 = vmatprep.mubr.f32.mxu0 0.0
    %2355 = vmatmul.mubr.f32.gmra.mxu0 %v2225
    %v2356 = vpop.f32.mrf.mxu0
    %v2357 = vadd.f32 %v2195, %v2356
    %v2358 = vpop.f32.mrf.mxu0
    %2359 = vmatprep.mubr.f32.mxu0 0.0
    %2360 = vmatmul.mubr.f32.gmra.mxu0 %v2228
    %v2361 = vpop.f32.mrf.mxu0
    %v2362 = vadd.f32 %v2195, %v2361
    %v2363 = vpop.f32.mrf.mxu0
    %2364 = vmatprep.mubr.f32.mxu0 0.0
    %2365 = vmatmul.mubr.f32.gmra.mxu0 %v2231
    %v2366 = vpop.f32.mrf.mxu0
    %v2367 = vadd.f32 %v2195, %v2366
    %v2368 = vpop.f32.mrf.mxu0
    %2369 = vmatprep.mubr.f32.mxu0 0.0
    %2370 = vmatmul.mubr.f32.gmra.mxu0 %v2234
    %v2371 = vpop.f32.mrf.mxu0
    %v2372 = vadd.f32 %v2195, %v2371
    %v2373 = vpop.f32.mrf.mxu0
    %2374 = vmatprep.mubr.f32.mxu0 0.0
    %2375 = vmatmul.mubr.f32.gmra.mxu0 %v2237
    %v2376 = vpop.f32.mrf.mxu0
    %v2377 = vadd.f32 %v2195, %v2376
    %v2378 = vpop.f32.mrf.mxu0
    %2379 = vmatprep.mubr.f32.mxu0 0.0
    %2380 = vmatmul.mubr.f32.gmra.mxu0 %v2240
    %v2381 = vpop.f32.mrf.mxu0
    %v2382 = vadd.f32 %v2195, %v2381
    %v2383 = vpop.f32.mrf.mxu0
    %2384 = vmatprep.mubr.f32.mxu0 0.0
    %2385 = vmatmul.mubr.f32.gmra.mxu0 %v2243
    %v2386 = vpop.f32.mrf.mxu0
    %v2387 = vadd.f32 %v2195, %v2386
    %v2388 = vpop.f32.mrf.mxu0
    %2389 = vdwg.mxu0
    %v2390 = vld [vmem:[%s0] sm:$0xff]
    %v2391 = vld [vmem:[%s0 + $0x8] sm:$0xff]
    %v2392 = vld [vmem:[%s0 + $0x10] sm:$0xff]
    %v2393 = vld [vmem:[%s0 + $0x18] sm:$0xff]
    %v2394 = vld [vmem:[%s0 + $0x20] sm:$0xff]
    %v2395 = vld [vmem:[%s0 + $0x28] sm:$0xff]
    %v2396 = vld [vmem:[%s0 + $0x30] sm:$0xff]
    %v2397 = vld [vmem:[%s0 + $0x38] sm:$0xff]
    %v2398 = vld [vmem:[%s0 + $0x40] sm:$0xff]
    %v2399 = vld [vmem:[%s0 + $0x48] sm:$0xff]
    %v2400 = vld [vmem:[%s0 + $0x50] sm:$0xff]
    %v2401 = vld [vmem:[%s0 + $0x58] sm:$0xff]
    %v2402 = vld [vmem:[%s0 + $0x60] sm:$0xff]
    %v2403 = vld [vmem:[%s0 + $0x68] sm:$0xff]
    %v2404 = vld [vmem:[%s0 + $0x70] sm:$0xff]
    %v2405 = vld [vmem:[%s0 + $0x78] sm:$0xff]
    %v2406 = vadd.f32 %v2312, %v2390
    %v2407 = vadd.f32 %v2317, %v2391
    %v2408 = vadd.f32 %v2322, %v2392
    %v2409 = vadd.f32 %v2327, %v2393
    %v2410 = vadd.f32 %v2332, %v2394
    %v2411 = vadd.f32 %v2337, %v2395
    %v2412 = vadd.f32 %v2342, %v2396
    %v2413 = vadd.f32 %v2347, %v2397
    %v2414 = vadd.f32 %v2352, %v2398
    %v2415 = vadd.f32 %v2357, %v2399
    %v2416 = vadd.f32 %v2362, %v2400
    %v2417 = vadd.f32 %v2367, %v2401
    %v2418 = vadd.f32 %v2372, %v2402
    %v2419 = vadd.f32 %v2377, %v2403
    %v2420 = vadd.f32 %v2382, %v2404
    %v2421 = vadd.f32 %v2387, %v2405
    %2422 = vst.msk [vmem:[%s13] sm:$0xff] %vm148, %v2406
    %2423 = vst.msk [vmem:[%s13 + $0x8] sm:$0xff] %vm148, %v2407
    %2424 = vst.msk [vmem:[%s13 + $0x10] sm:$0xff] %vm148, %v2408
    %2425 = vst.msk [vmem:[%s13 + $0x18] sm:$0xff] %vm148, %v2409
    %2426 = vst.msk [vmem:[%s13 + $0x20] sm:$0xff] %vm148, %v2410
    %2427 = vst.msk [vmem:[%s13 + $0x28] sm:$0xff] %vm148, %v2411
    %2428 = vst.msk [vmem:[%s13 + $0x30] sm:$0xff] %vm148, %v2412
    %2429 = vst.msk [vmem:[%s13 + $0x38] sm:$0xff] %vm148, %v2413
    %2430 = vst.msk [vmem:[%s13 + $0x40] sm:$0xff] %vm148, %v2414
    %2431 = vst.msk [vmem:[%s13 + $0x48] sm:$0xff] %vm148, %v2415
    %2432 = vst.msk [vmem:[%s13 + $0x50] sm:$0xff] %vm148, %v2416
    %2433 = vst.msk [vmem:[%s13 + $0x58] sm:$0xff] %vm148, %v2417
    %2434 = vst.msk [vmem:[%s13 + $0x60] sm:$0xff] %vm148, %v2418
    %2435 = vst.msk [vmem:[%s13 + $0x68] sm:$0xff] %vm148, %v2419
    %2436 = vst.msk [vmem:[%s13 + $0x70] sm:$0xff] %vm148, %v2420
    %2437 = vst.msk [vmem:[%s13 + $0x78] sm:$0xff] %vm148, %v2421
    // Predicated region
    $region74: #{tpu_custom_call.1} parent=1 // pred_check
      _
    $region75: #{tpu_custom_call.1} parent=1 // pred_check_branch
      %2439 = sbr.rel (0) target = $region77
    $region76: #{tpu_custom_call.1} parent=1 // pred_region
      _
    $region77: #{tpu_custom_call.1} parent=1 // pred_fallthru
      _
    // Predicated region
    $region78: #{tpu_custom_call.1} parent=1 // pred_check
      _
    $region79: #{tpu_custom_call.1} parent=1 // pred_check_branch
      %2441 = sbr.rel (0) target = $region81
    $region80: #{tpu_custom_call.1} parent=1 // pred_region
      _
    $region81: #{tpu_custom_call.1} parent=1 // pred_fallthru
      _
    %2442 = vsyncpa [#allocation5], 1
    %2443 = vsyncpa [#allocation7], 1
    %2444 = vsyncpa [#allocation10], 1

</llo_original>
